<compile_context>
chip_gen: v7x
topology: tpu7x:2x2x1
jax: 0.10.0
libtpu: 0.0.40
codegen_flags: <defaults>
</compile_context>

<pallas_src>
import functools

import jax
import jax.numpy as jnp
from jax.experimental import pallas as pl
from jax.experimental.pallas import tpu as pltpu


def _round_up(x, m):
    return (x + m - 1) // m * m


def _choose_blocks(n):
    """Pick (blk_m, blk_n, n_pad). blk_m is the fc-stream HBM reuse factor."""
    n_pad = _round_up(max(n, 1), 128)
    if n_pad <= 256:
        return n_pad, n_pad, n_pad                     # single tile
    if n_pad <= 1024:
        # Keep >= 2 row blocks so the leading "parallel" axis can shard across
        # both TensorCores on v7x.
        return 256, 256, _round_up(n_pad, 256)
    return 512, 256, _round_up(n_pad, 512)


def _supcon_tile_kernel(idr_ref, idc_ref, cnt_ref, fr_ref, fc_ref, out_ref,
                        l_sc, s_sc, *,
                        n_real, inv_t, scale_out, blk_m, blk_n,
                        has_col_pad, has_row_pad):
    i = pl.program_id(0)
    j = pl.program_id(1)
    last_j = pl.num_programs(1) - 1

    @pl.when(j == 0)
    def _init():
        l_sc[...] = jnp.zeros_like(l_sc)
        s_sc[...] = jnp.zeros_like(s_sc)

    # [blk_m, blk_n] logits tile on the MXU (bf16 x bf16 -> f32 accumulate);
    # contraction over the last dim of both tiles -> no materialized transpose.
    logits = jax.lax.dot_general(
        fr_ref[...], fc_ref[...],
        (((1,), (1,)), ((), ())),
        preferred_element_type=jnp.float32)
    # 1/temperature applied to the f32 logits (one fused VPU mul per logit).
    logits = logits * inv_t

    # Positive-pair mask (label equality); needed on every tile.
    pos = idr_ref[...] == idc_ref[...]                  # [blk_m, blk_n] bool

    # Fixed LSE shift: rows are unit-norm, so scaled logits <= ~1/T.  The LSE
    # identity is exact for any constant shift; this removes the running max.
    # TODO(synk): for extreme temperatures (< ~0.025) exp(-2/T) underflows f32;
    # an online max would be needed in that regime.
    m_fixed = inv_t

    # Only diagonal-intersecting tiles and tiles containing padded columns need
    # the self/padding mask; interior tiles take the cheap path below.
    needs_mask = (i * blk_m < (j + 1) * blk_n) & (j * blk_n < (i + 1) * blk_m)
    if has_col_pad:
        needs_mask = needs_mask | ((j + 1) * blk_n > n_real)

    @pl.when(jnp.logical_not(needs_mask))
    def _interior():
        l_sc[...] += jnp.sum(jnp.exp(logits - m_fixed), axis=1, keepdims=True)
        s_sc[...] += jnp.sum(jnp.where(pos, logits, 0.0), axis=1, keepdims=True)

    @pl.when(needs_mask)
    def _masked():
        row_g = i * blk_m + jax.lax.broadcasted_iota(jnp.int32, (blk_m, blk_n), 0)
        col_g = j * blk_n + jax.lax.broadcasted_iota(jnp.int32, (blk_m, blk_n), 1)
        keep = row_g != col_g                           # drop self-similarity
        if has_col_pad:
            keep = keep & (col_g < n_real)              # drop padded columns
        l_sc[...] += jnp.sum(jnp.where(keep, jnp.exp(logits - m_fixed), 0.0),
                             axis=1, keepdims=True)
        s_sc[...] += jnp.sum(jnp.where(keep & pos, logits, 0.0),
                             axis=1, keepdims=True)

    @pl.when(j == last_j)
    def _finalize():
        lse = m_fixed + jnp.log(l_sc[...])
        # Rows with zero positives give 0/0 = NaN, matching PyTorch.
        mean_log_prob_pos = s_sc[...] / cnt_ref[...] - lse
        loss_row = scale_out * mean_log_prob_pos        # [blk_m, 1]
        if has_row_pad:
            row_g = i * blk_m + jax.lax.broadcasted_iota(jnp.int32, (blk_m, 1), 0)
            loss_row = jnp.where(row_g < n_real, loss_row, 0.0)
        block_sum = jnp.sum(loss_row)
        # Lane-dense (8,128) output slab: block partial sum at [0, 0], zeros
        # elsewhere -> unmasked vector stores instead of a narrow (N,1) column.
        sub = jax.lax.broadcasted_iota(jnp.int32, (8, 128), 0)
        lane = jax.lax.broadcasted_iota(jnp.int32, (8, 128), 1)
        out_ref[...] = jnp.where((sub == 0) & (lane == 0),
                                 block_sum, 0.0).reshape(1, 8, 128)


def supcon_loss(features, labels=None, *, temperature=0.07,
                base_temperature=None, norm_ind=False,
                block_m=None, block_n=None, mxu_bf16=True):
    """JAX/Pallas equivalent of SupConLoss.forward.

    features: [bsz, n_views, ...] (trailing dims flattened), float
    labels:   optional [bsz] int labels
    mxu_bf16: run the logits matmul with bf16 operands / f32 accumulate
              (default; set False for full-f32 fidelity).
    """
    if base_temperature is None:
        base_temperature = temperature

    features = jnp.asarray(features)
    if features.ndim < 3:
        raise ValueError('`features` needs to be [bsz, n_views, ...], '
                         'at least 3 dimensions are required')
    if features.ndim > 3:
        features = features.reshape(features.shape[0], features.shape[1], -1)
    bsz, n_views, dim = features.shape
    n = bsz * n_views

    # norm_ind=True (per-view normalize over dim=2) is numerically identical
    # to norm_ind=False: normalization is per (b, v) row either way.
    del norm_ind

    # contrast_feature = cat(unbind(features, dim=1), dim=0)   (view-major)
    a = jnp.transpose(features, (1, 0, 2)).reshape(n, dim).astype(jnp.float32)
    # L2 normalization hoisted out of the kernel; F.normalize eps=1e-12.
    a = a * jax.lax.rsqrt(jnp.maximum(jnp.sum(a * a, axis=1, keepdims=True),
                                      1e-24))
    feat_dtype = jnp.bfloat16 if mxu_bf16 else jnp.float32
    a = a.astype(feat_dtype)

    if labels is None:
        ids_b = jnp.arange(bsz, dtype=jnp.int32)        # eye(bsz) mask
        same_in_batch = jnp.ones((bsz,), jnp.float32)
    else:
        labels = jnp.asarray(labels).reshape(-1).astype(jnp.int32)
        if labels.shape[0] != bsz:
            raise ValueError('Num of labels does not match num of features')
        ids_b = labels
        same_in_batch = jnp.sum(
            (ids_b[:, None] == ids_b[None, :]).astype(jnp.float32), axis=1)
    ids = jnp.tile(ids_b, (n_views,))                   # [N], view-major order
    # Per-row positive count (feature-independent): n_views * same-label - 1.
    cnt = jnp.tile(n_views * same_in_batch - 1.0, (n_views,))

    if block_m is None or block_n is None:
        blk_m, blk_n, n_pad = _choose_blocks(n)
    else:
        blk_m, blk_n = int(block_m), int(block_n)
        if blk_n % 128 or blk_m % blk_n:
            raise ValueError('block_n must be a multiple of 128 and divide block_m')
        n_pad = _round_up(n, blk_m)
    d_pad = _round_up(dim, 128)

    a = jnp.pad(a, ((0, n_pad - n), (0, d_pad - dim)))
    ids = jnp.pad(ids, (0, n_pad - n))
    cnt = jnp.pad(cnt, (0, n_pad - n), constant_values=1.0)  # no 0/0 on pad rows
    ids_row = ids.reshape(n_pad, 1)
    ids_col = ids.reshape(1, n_pad)
    cnt_col = cnt.reshape(n_pad, 1)

    kernel = functools.partial(
        _supcon_tile_kernel,
        n_real=n,
        inv_t=float(1.0 / temperature),
        scale_out=float(-(temperature / base_temperature)),
        blk_m=blk_m, blk_n=blk_n,
        has_col_pad=n_pad > n, has_row_pad=n_pad > n)

    grid = (n_pad // blk_m, n_pad // blk_n)

    # VMEM budget: double-buffered feature tiles + a few [blk_m, blk_n] f32
    # temporaries; capped at 48 MiB (v7x has 64 MiB physical VMEM).
    feat_bytes = jnp.dtype(feat_dtype).itemsize
    vmem_est = (2 * (blk_m + blk_n) * d_pad * feat_bytes
                + 6 * blk_m * blk_n * 4
                + (2 << 20))
    vmem_limit = int(min(max(vmem_est, 32 << 20), 48 << 20))

    per_block = pl.pallas_call(
        kernel,
        out_shape=jax.ShapeDtypeStruct((n_pad // blk_m, 8, 128), jnp.float32),
        grid_spec=pltpu.PrefetchScalarGridSpec(
            num_scalar_prefetch=0,
            grid=grid,
            in_specs=[
                pl.BlockSpec((blk_m, 1), lambda i, j: (i, 0)),      # row ids
                pl.BlockSpec((1, blk_n), lambda i, j: (0, j)),      # col ids
                pl.BlockSpec((blk_m, 1), lambda i, j: (i, 0)),      # pos counts
                pl.BlockSpec((blk_m, d_pad), lambda i, j: (i, 0)),  # anchor feats
                # TODO(synk): add pipeline_mode=pl.Buffered(3) here if profiling
                # shows exposed DMA at row-block transitions.
                pl.BlockSpec((blk_n, d_pad), lambda i, j: (j, 0)),  # contrast feats
            ],
            out_specs=pl.BlockSpec((1, 8, 128), lambda i, j: (i, 0, 0)),
            scratch_shapes=[pltpu.VMEM((blk_m, 1), jnp.float32)] * 2),
        compiler_params=pltpu.CompilerParams(
            dimension_semantics=("parallel", "arbitrary"),
            vmem_limit_bytes=vmem_limit),
    )(ids_row, ids_col, cnt_col, a, a)

    # loss.view(anchor_count, batch_size).mean() == sum over all real rows / N.
    return jnp.sum(per_block) / n


def _reference_supcon(features, labels, temperature, base_temperature):
    # Pure-JAX reference mirroring the PyTorch code (for sanity checking).
    bsz, n_views, dim = features.shape
    f = features / jnp.maximum(
        jnp.sqrt(jnp.sum(features ** 2, axis=2, keepdims=True)), 1e-12)
    a = jnp.transpose(f, (1, 0, 2)).reshape(bsz * n_views, dim)
    if labels is None:
        base_mask = jnp.eye(bsz, dtype=jnp.float32)
    else:
        lab = labels.reshape(-1, 1)
        base_mask = (lab == lab.T).astype(jnp.float32)
    mask = jnp.tile(base_mask, (n_views, n_views))
    logits = a @ a.T / temperature
    logits = logits - jnp.max(logits, axis=1, keepdims=True)
    n = bsz * n_views
    logits_mask = 1.0 - jnp.eye(n, dtype=jnp.float32)
    mask = mask * logits_mask
    exp_logits = jnp.exp(logits) * logits_mask
    log_prob = logits - jnp.log(jnp.sum(exp_logits, axis=1, keepdims=True))
    mean_log_prob_pos = jnp.sum(mask * log_prob, axis=1) / jnp.sum(mask, axis=1)
    return jnp.mean(-(temperature / base_temperature) * mean_log_prob_pos)


if __name__ == "__main__":
    key = jax.random.PRNGKey(0)
    k1, k2, k3, k4, k5 = jax.random.split(key, 5)
    T = 0.07

    # --- small case: single tile; bf16 (default) and f32 MXU paths ---
    feats = jax.random.normal(k1, (4, 2, 32), dtype=jnp.float32)
    labels = jnp.array([0, 1, 0, 1], dtype=jnp.int32)
    ref = _reference_supcon(feats, labels, T, T)

    out_bf16 = jax.block_until_ready(supcon_loss(feats, labels, temperature=T))
    assert jnp.allclose(out_bf16, ref, rtol=3e-2, atol=2e-1), (out_bf16, ref)

    out_f32 = jax.block_until_ready(
        supcon_loss(feats, labels, temperature=T, mxu_bf16=False))
    assert jnp.allclose(out_f32, ref, rtol=2e-4, atol=2e-4), (out_f32, ref)

    # labels=None (SimCLR-style eye mask), f32 path, tight tolerance.
    ref_n = _reference_supcon(feats, None, T, T)
    out_n = jax.block_until_ready(
        supcon_loss(feats, None, temperature=T, mxu_bf16=False))
    assert jnp.allclose(out_n, ref_n, rtol=2e-4, atol=2e-4), (out_n, ref_n)

    # --- 2x2 grid: exercises interior / diagonal / padded-column tile paths ---
    feats2 = jax.random.normal(k2, (100, 2, 48), dtype=jnp.float32)   # N=200
    labels2 = jax.random.randint(k3, (100,), 0, 5, dtype=jnp.int32)
    ref2 = _reference_supcon(feats2, labels2, T, T)
    out2 = jax.block_until_ready(
        supcon_loss(feats2, labels2, temperature=T, mxu_bf16=False,
                    block_m=128, block_n=128))
    assert jnp.allclose(out2, ref2, rtol=5e-4, atol=5e-4), (out2, ref2)

    # --- rectangular tiles (blk_m != blk_n), padding spanning two column
    #     blocks, default bf16 MXU path ---
    feats3 = jax.random.normal(k4, (150, 2, 40), dtype=jnp.float32)   # N=300
    labels3 = jax.random.randint(k5, (150,), 0, 7, dtype=jnp.int32)
    ref3 = _reference_supcon(feats3, labels3, T, T)
    out3 = jax.block_until_ready(
        supcon_loss(feats3, labels3, temperature=T, block_m=256, block_n=128))
    assert jnp.allclose(out3, ref3, rtol=3e-2, atol=2e-1), (out3, ref3)

    print("KERNEL_OK")
</pallas_src>

<mosaic_0001>
module attributes {stable_mosaic.version = 11 : i64} {
  func.func @_supcon_tile_kernel(%arg0: i32, %arg1: i32, %arg2: memref<128x1xi32, #tpu.memory_space<vmem>>, %arg3: memref<1x128xi32, #tpu.memory_space<vmem>>, %arg4: memref<128x1xf32, #tpu.memory_space<vmem>>, %arg5: memref<128x128xbf16, #tpu.memory_space<vmem>>, %arg6: memref<128x128xbf16, #tpu.memory_space<vmem>>, %arg7: memref<1x8x128xf32, #tpu.memory_space<vmem>>, %arg8: memref<128x1xf32, #tpu.memory_space<vmem>>, %arg9: memref<128x1xf32, #tpu.memory_space<vmem>>) attributes {dimension_semantics = [#tpu.dimension_semantics<parallel>, #tpu.dimension_semantics<arbitrary>], iteration_bounds = array<i64: 1, 1>, scalar_prefetch = 0 : i64, scratch_operands = 2 : i64, tpu.core_type = #tpu.core_type<tc>, window_params = [{transform_indices = @transform_0, window_bounds = array<i64: 128, 1>}, {transform_indices = @transform_1, window_bounds = array<i64: 1, 128>}, {transform_indices = @transform_2, window_bounds = array<i64: 128, 1>}, {transform_indices = @transform_3, window_bounds = array<i64: 128, 128>}, {transform_indices = @transform_4, window_bounds = array<i64: 128, 128>}, {transform_indices = @transform_5, window_bounds = array<i64: 1, 8, 128>}]} {
    %c0_i32 = arith.constant 0 : i32
    %0 = arith.cmpi eq, %arg1, %c0_i32 : i32
    %1 = arith.extui %0 : i1 to i32
    %c0_i32_0 = arith.constant 0 : i32
    %2 = arith.cmpi ne, %1, %c0_i32_0 : i32
    scf.if %2 {
      %cst_19 = arith.constant 0.000000e+00 : f32
      %34 = vector.broadcast %cst_19 : f32 to vector<128x1xf32>
      %c0_20 = arith.constant 0 : index
      %c0_21 = arith.constant 0 : index
      %35 = vector.load %arg8[%c0_20, %c0_21] : memref<128x1xf32, #tpu.memory_space<vmem>>, vector<128x1xf32>
      tpu.vector_store %arg8[%c0_20, %c0_21], %34 {strides = array<i32>} : memref<128x1xf32, #tpu.memory_space<vmem>>, vector<128x1xf32>,
      %cst_22 = arith.constant 0.000000e+00 : f32
      %36 = vector.broadcast %cst_22 : f32 to vector<128x1xf32>
      %c0_23 = arith.constant 0 : index
      %c0_24 = arith.constant 0 : index
      %37 = vector.load %arg9[%c0_23, %c0_24] : memref<128x1xf32, #tpu.memory_space<vmem>>, vector<128x1xf32>
      tpu.vector_store %arg9[%c0_23, %c0_24], %36 {strides = array<i32>} : memref<128x1xf32, #tpu.memory_space<vmem>>, vector<128x1xf32>,
    } else {
    }
    %c0 = arith.constant 0 : index
    %c0_1 = arith.constant 0 : index
    %3 = vector.load %arg5[%c0, %c0_1] : memref<128x128xbf16, #tpu.memory_space<vmem>>, vector<128x128xbf16>
    %c0_2 = arith.constant 0 : index
    %c0_3 = arith.constant 0 : index
    %4 = vector.load %arg6[%c0_2, %c0_3] : memref<128x128xbf16, #tpu.memory_space<vmem>>, vector<128x128xbf16>
    %cst = arith.constant dense<0.000000e+00> : vector<128x128xf32>
    %5 = tpu.matmul %3, %4, %cst {dimension_numbers = #tpu.dot_dimension_numbers<[1], [1], [0], [0], [0, 0, 1, 0], [], []>} : vector<128x128xbf16>, vector<128x128xbf16>, vector<128x128xf32> -> vector<128x128xf32>
    %cst_4 = arith.constant 14.2857141 : f32
    %6 = vector.broadcast %cst_4 : f32 to vector<128x128xf32>
    %7 = arith.mulf %5, %6 : vector<128x128xf32>
    %c0_5 = arith.constant 0 : index
    %c0_6 = arith.constant 0 : index
    %8 = vector.load %arg2[%c0_5, %c0_6] : memref<128x1xi32, #tpu.memory_space<vmem>>, vector<128x1xi32>
    %c0_7 = arith.constant 0 : index
    %c0_8 = arith.constant 0 : index
    %9 = vector.load %arg3[%c0_7, %c0_8] : memref<1x128xi32, #tpu.memory_space<vmem>>, vector<1x128xi32>
    %10 = vector.broadcast %8 : vector<128x1xi32> to vector<128x128xi32>
    %11 = vector.broadcast %9 : vector<1x128xi32> to vector<128x128xi32>
    %12 = arith.cmpi eq, %10, %11 : vector<128x128xi32>
    %c128_i32 = arith.constant 128 : i32
    %13 = arith.muli %arg0, %c128_i32 : i32
    %c1_i32 = arith.constant 1 : i32
    %14 = arith.addi %arg1, %c1_i32 : i32
    %c128_i32_9 = arith.constant 128 : i32
    %15 = arith.muli %14, %c128_i32_9 : i32
    %16 = arith.cmpi slt, %13, %15 : i32
    %c128_i32_10 = arith.constant 128 : i32
    %17 = arith.muli %arg1, %c128_i32_10 : i32
    %c1_i32_11 = arith.constant 1 : i32
    %18 = arith.addi %arg0, %c1_i32_11 : i32
    %c128_i32_12 = arith.constant 128 : i32
    %19 = arith.muli %18, %c128_i32_12 : i32
    %20 = arith.cmpi slt, %17, %19 : i32
    %21 = arith.andi %16, %20 : i1
    %c1_i32_13 = arith.constant 1 : i32
    %22 = arith.addi %arg1, %c1_i32_13 : i32
    %c128_i32_14 = arith.constant 128 : i32
    %23 = arith.muli %22, %c128_i32_14 : i32
    %c8_i32 = arith.constant 8 : i32
    %24 = arith.cmpi sgt, %23, %c8_i32 : i32
    %25 = arith.ori %21, %24 : i1
    %true = arith.constant true
    %26 = arith.xori %25, %true : i1
    %27 = arith.extui %26 : i1 to i32
    %c0_i32_15 = arith.constant 0 : i32
    %28 = arith.cmpi ne, %27, %c0_i32_15 : i32
    scf.if %28 {
      %c0_19 = arith.constant 0 : index
      %c0_20 = arith.constant 0 : index
      %34 = vector.load %arg8[%c0_19, %c0_20] : memref<128x1xf32, #tpu.memory_space<vmem>>, vector<128x1xf32>
      %cst_21 = arith.constant 14.2857141 : f32
      %35 = vector.broadcast %cst_21 : f32 to vector<128x128xf32>
      %36 = arith.subf %7, %35 : vector<128x128xf32>
      %37 = math.exp %36 : vector<128x128xf32>
      %cst_22 = arith.constant dense<0.000000e+00> : vector<128xf32>
      %38 = vector.multi_reduction <add>, %37, %cst_22 [1] : vector<128x128xf32> to vector<128xf32>
      %39 = vector.shape_cast %38 : vector<128xf32> to vector<128x1xf32>
      %40 = arith.addf %34, %39 : vector<128x1xf32>
      %c0_23 = arith.constant 0 : index
      %c0_24 = arith.constant 0 : index
      %41 = vector.load %arg8[%c0_23, %c0_24] : memref<128x1xf32, #tpu.memory_space<vmem>>, vector<128x1xf32>
      tpu.vector_store %arg8[%c0_23, %c0_24], %40 {strides = array<i32>} : memref<128x1xf32, #tpu.memory_space<vmem>>, vector<128x1xf32>,
      %c0_25 = arith.constant 0 : index
      %c0_26 = arith.constant 0 : index
      %42 = vector.load %arg9[%c0_25, %c0_26] : memref<128x1xf32, #tpu.memory_space<vmem>>, vector<128x1xf32>
      %cst_27 = arith.constant 0.000000e+00 : f32
      %43 = vector.broadcast %cst_27 : f32 to vector<128x128xf32>
      %44 = arith.select %12, %7, %43 : vector<128x128xi1>, vector<128x128xf32>
      %cst_28 = arith.constant dense<0.000000e+00> : vector<128xf32>
      %45 = vector.multi_reduction <add>, %44, %cst_28 [1] : vector<128x128xf32> to vector<128xf32>
      %46 = vector.shape_cast %45 : vector<128xf32> to vector<128x1xf32>
      %47 = arith.addf %42, %46 : vector<128x1xf32>
      %c0_29 = arith.constant 0 : index
      %c0_30 = arith.constant 0 : index
      %48 = vector.load %arg9[%c0_29, %c0_30] : memref<128x1xf32, #tpu.memory_space<vmem>>, vector<128x1xf32>
      tpu.vector_store %arg9[%c0_29, %c0_30], %47 {strides = array<i32>} : memref<128x1xf32, #tpu.memory_space<vmem>>, vector<128x1xf32>,
    } else {
    }
    %29 = arith.extui %25 : i1 to i32
    %c0_i32_16 = arith.constant 0 : i32
    %30 = arith.cmpi ne, %29, %c0_i32_16 : i32
    scf.if %30 {
      %c128_i32_19 = arith.constant 128 : i32
      %34 = arith.muli %arg0, %c128_i32_19 : i32
      %35 = tpu.iota {dimensions = array<i32: 0>} : vector<128x128xi32>
      %36 = vector.broadcast %34 : i32 to vector<128x128xi32>
      %37 = arith.addi %36, %35 : vector<128x128xi32>
      %c128_i32_20 = arith.constant 128 : i32
      %38 = arith.muli %arg1, %c128_i32_20 : i32
      %39 = tpu.iota {dimensions = array<i32: 1>} : vector<128x128xi32>
      %40 = vector.broadcast %38 : i32 to vector<128x128xi32>
      %41 = arith.addi %40, %39 : vector<128x128xi32>
      %42 = arith.cmpi ne, %37, %41 : vector<128x128xi32>
      %c8_i32_21 = arith.constant 8 : i32
      %43 = vector.broadcast %c8_i32_21 : i32 to vector<128x128xi32>
      %44 = arith.cmpi slt, %41, %43 : vector<128x128xi32>
      %45 = arith.andi %42, %44 : vector<128x128xi1>
      %c0_22 = arith.constant 0 : index
      %c0_23 = arith.constant 0 : index
      %46 = vector.load %arg8[%c0_22, %c0_23] : memref<128x1xf32, #tpu.memory_space<vmem>>, vector<128x1xf32>
      %cst_24 = arith.constant 14.2857141 : f32
      %47 = vector.broadcast %cst_24 : f32 to vector<128x128xf32>
      %48 = arith.subf %7, %47 : vector<128x128xf32>
      %49 = math.exp %48 : vector<128x128xf32>
      %cst_25 = arith.constant 0.000000e+00 : f32
      %50 = vector.broadcast %cst_25 : f32 to vector<128x128xf32>
      %51 = arith.select %45, %49, %50 : vector<128x128xi1>, vector<128x128xf32>
      %cst_26 = arith.constant dense<0.000000e+00> : vector<128xf32>
      %52 = vector.multi_reduction <add>, %51, %cst_26 [1] : vector<128x128xf32> to vector<128xf32>
      %53 = vector.shape_cast %52 : vector<128xf32> to vector<128x1xf32>
      %54 = arith.addf %46, %53 : vector<128x1xf32>
      %c0_27 = arith.constant 0 : index
      %c0_28 = arith.constant 0 : index
      %55 = vector.load %arg8[%c0_27, %c0_28] : memref<128x1xf32, #tpu.memory_space<vmem>>, vector<128x1xf32>
      tpu.vector_store %arg8[%c0_27, %c0_28], %54 {strides = array<i32>} : memref<128x1xf32, #tpu.memory_space<vmem>>, vector<128x1xf32>,
      %c0_29 = arith.constant 0 : index
      %c0_30 = arith.constant 0 : index
      %56 = vector.load %arg9[%c0_29, %c0_30] : memref<128x1xf32, #tpu.memory_space<vmem>>, vector<128x1xf32>
      %57 = arith.andi %45, %12 : vector<128x128xi1>
      %cst_31 = arith.constant 0.000000e+00 : f32
      %58 = vector.broadcast %cst_31 : f32 to vector<128x128xf32>
      %59 = arith.select %57, %7, %58 : vector<128x128xi1>, vector<128x128xf32>
      %cst_32 = arith.constant dense<0.000000e+00> : vector<128xf32>
      %60 = vector.multi_reduction <add>, %59, %cst_32 [1] : vector<128x128xf32> to vector<128xf32>
      %61 = vector.shape_cast %60 : vector<128xf32> to vector<128x1xf32>
      %62 = arith.addf %56, %61 : vector<128x1xf32>
      %c0_33 = arith.constant 0 : index
      %c0_34 = arith.constant 0 : index
      %63 = vector.load %arg9[%c0_33, %c0_34] : memref<128x1xf32, #tpu.memory_space<vmem>>, vector<128x1xf32>
      tpu.vector_store %arg9[%c0_33, %c0_34], %62 {strides = array<i32>} : memref<128x1xf32, #tpu.memory_space<vmem>>, vector<128x1xf32>,
    } else {
    }
    %c0_i32_17 = arith.constant 0 : i32
    %31 = arith.cmpi eq, %arg1, %c0_i32_17 : i32
    %32 = arith.extui %31 : i1 to i32
    %c0_i32_18 = arith.constant 0 : i32
    %33 = arith.cmpi ne, %32, %c0_i32_18 : i32
    scf.if %33 {
      %c0_19 = arith.constant 0 : index
      %c0_20 = arith.constant 0 : index
      %34 = vector.load %arg8[%c0_19, %c0_20] : memref<128x1xf32, #tpu.memory_space<vmem>>, vector<128x1xf32>
      %35 = math.log %34 : vector<128x1xf32>
      %cst_21 = arith.constant 14.2857141 : f32
      %36 = vector.broadcast %cst_21 : f32 to vector<128x1xf32>
      %37 = arith.addf %36, %35 : vector<128x1xf32>
      %c0_22 = arith.constant 0 : index
      %c0_23 = arith.constant 0 : index
      %38 = vector.load %arg9[%c0_22, %c0_23] : memref<128x1xf32, #tpu.memory_space<vmem>>, vector<128x1xf32>
      %c0_24 = arith.constant 0 : index
      %c0_25 = arith.constant 0 : index
      %39 = vector.load %arg4[%c0_24, %c0_25] : memref<128x1xf32, #tpu.memory_space<vmem>>, vector<128x1xf32>
      %40 = arith.divf %38, %39 : vector<128x1xf32>
      %41 = arith.subf %40, %37 : vector<128x1xf32>
      %cst_26 = arith.constant -1.000000e+00 : f32
      %42 = vector.broadcast %cst_26 : f32 to vector<128x1xf32>
      %43 = arith.mulf %42, %41 : vector<128x1xf32>
      %c128_i32_27 = arith.constant 128 : i32
      %44 = arith.muli %arg0, %c128_i32_27 : i32
      %45 = tpu.iota {dimensions = array<i32: 0>} : vector<128x1xi32>
      %46 = vector.broadcast %44 : i32 to vector<128x1xi32>
      %47 = arith.addi %46, %45 : vector<128x1xi32>
      %c8_i32_28 = arith.constant 8 : i32
      %48 = vector.broadcast %c8_i32_28 : i32 to vector<128x1xi32>
      %49 = arith.cmpi slt, %47, %48 : vector<128x1xi32>
      %cst_29 = arith.constant 0.000000e+00 : f32
      %50 = vector.broadcast %cst_29 : f32 to vector<128x1xf32>
      %51 = arith.select %49, %43, %50 : vector<128x1xi1>, vector<128x1xf32>
      %52 = vector.shape_cast %51 : vector<128x1xf32> to vector<1x128x1xf32>
      %cst_30 = arith.constant dense<0.000000e+00> : vector<1xf32>
      %53 = vector.multi_reduction <add>, %52, %cst_30 [1, 2] : vector<1x128x1xf32> to vector<1xf32>
      %54 = vector.shape_cast %53 : vector<1xf32> to vector<1x1x1xf32>
      %55 = vector.extract %54[0, 0, 0] : f32 from vector<1x1x1xf32>
      %56 = tpu.iota {dimensions = array<i32: 0>} : vector<8x128xi32>
      %57 = tpu.iota {dimensions = array<i32: 1>} : vector<8x128xi32>
      %c0_i32_31 = arith.constant 0 : i32
      %58 = vector.broadcast %c0_i32_31 : i32 to vector<8x128xi32>
      %59 = arith.cmpi eq, %56, %58 : vector<8x128xi32>
      %c0_i32_32 = arith.constant 0 : i32
      %60 = vector.broadcast %c0_i32_32 : i32 to vector<8x128xi32>
      %61 = arith.cmpi eq, %57, %60 : vector<8x128xi32>
      %62 = arith.andi %59, %61 : vector<8x128xi1>
      %cst_33 = arith.constant 0.000000e+00 : f32
      %63 = vector.broadcast %55 : f32 to vector<8x128xf32>
      %64 = vector.broadcast %cst_33 : f32 to vector<8x128xf32>
      %65 = arith.select %62, %63, %64 : vector<8x128xi1>, vector<8x128xf32>
      %66 = vector.shape_cast %65 : vector<8x128xf32> to vector<1x8x128xf32>
      %c0_34 = arith.constant 0 : index
      %c0_35 = arith.constant 0 : index
      %c0_36 = arith.constant 0 : index
      %67 = vector.load %arg7[%c0_34, %c0_35, %c0_36] : memref<1x8x128xf32, #tpu.memory_space<vmem>>, vector<1x8x128xf32>
      tpu.vector_store %arg7[%c0_34, %c0_35, %c0_36], %66 {strides = array<i32>} : memref<1x8x128xf32, #tpu.memory_space<vmem>>, vector<1x8x128xf32>,
    } else {
    }
    return
  }
  func.func @transform_0(%arg0: i32, %arg1: i32) -> (i32, i32) {
    %c0_i32 = arith.constant 0 : i32
    %c0_i32_0 = arith.constant 0 : i32
    return %arg0, %c0_i32 : i32, i32
  }
  func.func @transform_1(%arg0: i32, %arg1: i32) -> (i32, i32) {
    %c0_i32 = arith.constant 0 : i32
    %c0_i32_0 = arith.constant 0 : i32
    return %c0_i32, %arg1 : i32, i32
  }
  func.func @transform_2(%arg0: i32, %arg1: i32) -> (i32, i32) {
    %c0_i32 = arith.constant 0 : i32
    %c0_i32_0 = arith.constant 0 : i32
    return %arg0, %c0_i32 : i32, i32
  }
  func.func @transform_3(%arg0: i32, %arg1: i32) -> (i32, i32) {
    %c0_i32 = arith.constant 0 : i32
    %c0_i32_0 = arith.constant 0 : i32
    return %arg0, %c0_i32 : i32, i32
  }
  func.func @transform_4(%arg0: i32, %arg1: i32) -> (i32, i32) {
    %c0_i32 = arith.constant 0 : i32
    %c0_i32_0 = arith.constant 0 : i32
    return %arg1, %c0_i32 : i32, i32
  }
  func.func @transform_5(%arg0: i32, %arg1: i32) -> (i32, i32, i32) {
    %c0_i32 = arith.constant 0 : i32
    %c0_i32_0 = arith.constant 0 : i32
    %c0_i32_1 = arith.constant 0 : i32
    return %arg0, %c0_i32, %c0_i32_0 : i32, i32, i32
  }
}

</mosaic_0001>

<llo_original>
// kernel: tpu_custom_call.1
$region0: #{tpu_custom_call.1}
  #allocation0 [shape = 'u32[]', space=smem, size = 0x4, offset = 0x4, fixed_abs, tag = 'smem constant byte address 0x4 - core index']
  #allocation1 [shape = 'u32[144,128]{1,0:T(1,128)}', space=vmem, size = 0x12000, scoped, tag = 'internal scratch']
  #allocation2 [shape = 'f32[128,1]{1,0:T(8,128)}', space=vmem, size = 0x10000, scoped, tag = 'scratch operand']
  #allocation3 [shape = 'f32[128,1]{1,0:T(8,128)}', space=vmem, size = 0x10000, scoped, tag = 'scratch operand']
  %s0 = inlined_call_operand.vmem [shape: s32[128,1], index: 0, kind: input, shape index: {}]
  %s1 = inlined_call_operand.vmem [shape: s32[1,128], index: 1, kind: input, shape index: {}]
  %s2 = inlined_call_operand.vmem [shape: f32[128,1], index: 2, kind: input, shape index: {}]
  %s3 = inlined_call_operand.vmem [shape: bf16[128,128], index: 3, kind: input, shape index: {}]
  %s4 = inlined_call_operand.vmem [shape: bf16[128,128], index: 4, kind: input, shape index: {}]
  %s5 = inlined_call_operand.hbm [shape: f32[1,8,128], index: 5, kind: output, shape index: {}]
  %s6 = sld [smem:[#allocation0]]
  $region46: #{tpu_custom_call.1} parent=0
    _
  %s8 = ssub.s32 1, %s6
  %s9 = scalar_select 0, %s8, %s6
  $region1: #{tpu_custom_call.1} parent=0
    #allocation4 [shape = 'u8[4096]{0}', space=vmem, size = 0x1000, scoped, tag = 'output window, operand 0, single buffered']
    #allocation5 [shape = 's32[1]{0}', space=sflag, size = 0x4, scoped, tag = 'scoped memory for tpu_custom_call.1']
    %10 = vsyncpa [#allocation5], 0
    // Predicated region
    $region2: #{tpu_custom_call.1} parent=1 // pred_check
      _
    $region3: #{tpu_custom_call.1} parent=1 // pred_check_branch
      %12 = sbr.rel (0) target = $region5
    $region4: #{tpu_custom_call.1} parent=1 // pred_region
      _
    $region5: #{tpu_custom_call.1} parent=1 // pred_fallthru
      _
    // Predicated region
    $region6: #{tpu_custom_call.1} parent=1 // pred_check
      _
    $region7: #{tpu_custom_call.1} parent=1 // pred_check_branch
      %14 = sbr.rel (0) target = $region9
    $region8: #{tpu_custom_call.1} parent=1 // pred_region
      _
    $region9: #{tpu_custom_call.1} parent=1 // pred_fallthru
      _
    // Predicated region
    $region10: #{tpu_custom_call.1} parent=1 // pred_check
      _
    $region11: #{tpu_custom_call.1} parent=1 // pred_check_branch
      %16 = sbr.rel (0) target = $region13
    $region12: #{tpu_custom_call.1} parent=1 // pred_region
      _
    $region13: #{tpu_custom_call.1} parent=1 // pred_fallthru
      _
    // Predicated region
    $region14: #{tpu_custom_call.1} parent=1 // pred_check
      _
    $region15: #{tpu_custom_call.1} parent=1 // pred_check_branch
      %18 = sbr.rel (0) target = $region17
    $region16: #{tpu_custom_call.1} parent=1 // pred_region
      _
    $region17: #{tpu_custom_call.1} parent=1 // pred_fallthru
      _
    // Predicated region
    $region18: #{tpu_custom_call.1} parent=1 // pred_check
      _
    $region19: #{tpu_custom_call.1} parent=1 // pred_check_branch
      %20 = sbr.rel (0) target = $region21
    $region20: #{tpu_custom_call.1} parent=1 // pred_region
      _
    $region21: #{tpu_custom_call.1} parent=1 // pred_fallthru
      _
    %p22 = scmp.eq.s32.totalorder 0, 0
    // Predicated region
    $region22: #{tpu_custom_call.1} parent=1 // pred_check
      %p23 = pneg %p22
    $region23: #{tpu_custom_call.1} parent=1 // pred_check_branch
      %25 = sbr.rel (%p23) target = $region25
    $region24: #{tpu_custom_call.1} parent=1 // pred_region
      %vm26 = vcmask 7168
      %27 = vst.msk [vmem:[#allocation2] sm:$0xff] %vm26, 0.0
      %28 = vst.msk [vmem:[#allocation2 + $0x8] sm:$0xff] %vm26, 0.0
      %29 = vst.msk [vmem:[#allocation2 + $0x10] sm:$0xff] %vm26, 0.0
      %30 = vst.msk [vmem:[#allocation2 + $0x18] sm:$0xff] %vm26, 0.0
      %31 = vst.msk [vmem:[#allocation2 + $0x20] sm:$0xff] %vm26, 0.0
      %32 = vst.msk [vmem:[#allocation2 + $0x28] sm:$0xff] %vm26, 0.0
      %33 = vst.msk [vmem:[#allocation2 + $0x30] sm:$0xff] %vm26, 0.0
      %34 = vst.msk [vmem:[#allocation2 + $0x38] sm:$0xff] %vm26, 0.0
      %35 = vst.msk [vmem:[#allocation2 + $0x40] sm:$0xff] %vm26, 0.0
      %36 = vst.msk [vmem:[#allocation2 + $0x48] sm:$0xff] %vm26, 0.0
      %37 = vst.msk [vmem:[#allocation2 + $0x50] sm:$0xff] %vm26, 0.0
      %38 = vst.msk [vmem:[#allocation2 + $0x58] sm:$0xff] %vm26, 0.0
      %39 = vst.msk [vmem:[#allocation2 + $0x60] sm:$0xff] %vm26, 0.0
      %40 = vst.msk [vmem:[#allocation2 + $0x68] sm:$0xff] %vm26, 0.0
      %41 = vst.msk [vmem:[#allocation2 + $0x70] sm:$0xff] %vm26, 0.0
      %42 = vst.msk [vmem:[#allocation2 + $0x78] sm:$0xff] %vm26, 0.0
      %43 = vst.msk [vmem:[#allocation3] sm:$0xff] %vm26, 0.0
      %44 = vst.msk [vmem:[#allocation3 + $0x8] sm:$0xff] %vm26, 0.0
      %45 = vst.msk [vmem:[#allocation3 + $0x10] sm:$0xff] %vm26, 0.0
      %46 = vst.msk [vmem:[#allocation3 + $0x18] sm:$0xff] %vm26, 0.0
      %47 = vst.msk [vmem:[#allocation3 + $0x20] sm:$0xff] %vm26, 0.0
      %48 = vst.msk [vmem:[#allocation3 + $0x28] sm:$0xff] %vm26, 0.0
      %49 = vst.msk [vmem:[#allocation3 + $0x30] sm:$0xff] %vm26, 0.0
      %50 = vst.msk [vmem:[#allocation3 + $0x38] sm:$0xff] %vm26, 0.0
      %51 = vst.msk [vmem:[#allocation3 + $0x40] sm:$0xff] %vm26, 0.0
      %52 = vst.msk [vmem:[#allocation3 + $0x48] sm:$0xff] %vm26, 0.0
      %53 = vst.msk [vmem:[#allocation3 + $0x50] sm:$0xff] %vm26, 0.0
      %54 = vst.msk [vmem:[#allocation3 + $0x58] sm:$0xff] %vm26, 0.0
      %55 = vst.msk [vmem:[#allocation3 + $0x60] sm:$0xff] %vm26, 0.0
      %56 = vst.msk [vmem:[#allocation3 + $0x68] sm:$0xff] %vm26, 0.0
      %57 = vst.msk [vmem:[#allocation3 + $0x70] sm:$0xff] %vm26, 0.0
      %58 = vst.msk [vmem:[#allocation3 + $0x78] sm:$0xff] %vm26, 0.0
    $region25: #{tpu_custom_call.1} parent=1 // pred_fallthru
      _
    %v59 = vld [vmem:[%s3] sm:$0xf]
    %v60 = vld [vmem:[%s3 + $0x4] sm:$0xf]
    %v61 = vld [vmem:[%s3 + $0x8] sm:$0xf]
    %v62 = vld [vmem:[%s3 + $0xc] sm:$0xf]
    %v63 = vld [vmem:[%s3 + $0x10] sm:$0xf]
    %v64 = vld [vmem:[%s3 + $0x14] sm:$0xf]
    %v65 = vld [vmem:[%s3 + $0x18] sm:$0xf]
    %v66 = vld [vmem:[%s3 + $0x1c] sm:$0xf]
    %v67 = vld [vmem:[%s3 + $0x20] sm:$0xf]
    %v68 = vld [vmem:[%s3 + $0x24] sm:$0xf]
    %v69 = vld [vmem:[%s3 + $0x28] sm:$0xf]
    %v70 = vld [vmem:[%s3 + $0x2c] sm:$0xf]
    %v71 = vld [vmem:[%s3 + $0x30] sm:$0xf]
    %v72 = vld [vmem:[%s3 + $0x34] sm:$0xf]
    %v73 = vld [vmem:[%s3 + $0x38] sm:$0xf]
    %v74 = vld [vmem:[%s3 + $0x3c] sm:$0xf]
    %v75 = vld [vmem:[%s4] sm:$0xf]
    %v76 = vld [vmem:[%s4 + $0x4] sm:$0xf]
    %v77 = vld [vmem:[%s4 + $0x8] sm:$0xf]
    %v78 = vld [vmem:[%s4 + $0xc] sm:$0xf]
    %v79 = vld [vmem:[%s4 + $0x10] sm:$0xf]
    %v80 = vld [vmem:[%s4 + $0x14] sm:$0xf]
    %v81 = vld [vmem:[%s4 + $0x18] sm:$0xf]
    %v82 = vld [vmem:[%s4 + $0x1c] sm:$0xf]
    %v83 = vld [vmem:[%s4 + $0x20] sm:$0xf]
    %v84 = vld [vmem:[%s4 + $0x24] sm:$0xf]
    %v85 = vld [vmem:[%s4 + $0x28] sm:$0xf]
    %v86 = vld [vmem:[%s4 + $0x2c] sm:$0xf]
    %v87 = vld [vmem:[%s4 + $0x30] sm:$0xf]
    %v88 = vld [vmem:[%s4 + $0x34] sm:$0xf]
    %v89 = vld [vmem:[%s4 + $0x38] sm:$0xf]
    %v90 = vld [vmem:[%s4 + $0x3c] sm:$0xf]
    %v107 = vunpack.c.l.b16 %v59
    %v108 = vunpack.c.l.b16 %v60
    %v109 = vunpack.c.l.b16 %v61
    %v110 = vunpack.c.l.b16 %v62
    %v111 = vunpack.c.l.b16 %v63
    %v112 = vunpack.c.l.b16 %v64
    %v113 = vunpack.c.l.b16 %v65
    %v114 = vunpack.c.l.b16 %v66
    %v115 = vunpack.c.l.b16 %v67
    %v116 = vunpack.c.l.b16 %v68
    %v117 = vunpack.c.l.b16 %v69
    %v118 = vunpack.c.l.b16 %v70
    %v119 = vunpack.c.l.b16 %v71
    %v120 = vunpack.c.l.b16 %v72
    %v121 = vunpack.c.l.b16 %v73
    %v122 = vunpack.c.l.b16 %v74
    %v123 = vpack.c.b16 %v108, %v107
    %v124 = vpack.c.b16 %v110, %v109
    %v125 = vpack.c.b16 %v112, %v111
    %v126 = vpack.c.b16 %v114, %v113
    %v127 = vpack.c.b16 %v116, %v115
    %v128 = vpack.c.b16 %v118, %v117
    %v129 = vpack.c.b16 %v120, %v119
    %v130 = vpack.c.b16 %v122, %v121
    %v155 = vunpack.c.l.b16 %v75
    %v156 = vunpack.c.l.b16 %v76
    %v157 = vunpack.c.l.b16 %v77
    %v158 = vunpack.c.l.b16 %v78
    %v159 = vunpack.c.l.b16 %v79
    %v160 = vunpack.c.l.b16 %v80
    %v161 = vunpack.c.l.b16 %v81
    %v162 = vunpack.c.l.b16 %v82
    %v163 = vunpack.c.l.b16 %v83
    %v164 = vunpack.c.l.b16 %v84
    %v165 = vunpack.c.l.b16 %v85
    %v166 = vunpack.c.l.b16 %v86
    %v167 = vunpack.c.l.b16 %v87
    %v168 = vunpack.c.l.b16 %v88
    %v169 = vunpack.c.l.b16 %v89
    %v170 = vunpack.c.l.b16 %v90
    %v171 = vpack.c.b16 %v156, %v155
    %v172 = vpack.c.b16 %v158, %v157
    %v173 = vpack.c.b16 %v160, %v159
    %v174 = vpack.c.b16 %v162, %v161
    %v175 = vpack.c.b16 %v164, %v163
    %v176 = vpack.c.b16 %v166, %v165
    %v177 = vpack.c.b16 %v168, %v167
    %v178 = vpack.c.b16 %v170, %v169
    %187 = vmatprep.subr.bf16.mxu0 0
    %188 = vmatpush1.bf16.xpose.msra.mxu0 %v171
    %189 = vmatprep.subr.bf16.mxu0 0
    %190 = vmatpush1.bf16.xpose.msra.mxu0 %v172
    %191 = vmatprep.subr.bf16.mxu0 0
    %192 = vmatpush1.bf16.xpose.msra.mxu0 %v173
    %193 = vmatprep.subr.bf16.mxu0 0
    %194 = vmatpush1.bf16.xpose.msra.mxu0 %v174
    %195 = vmatprep.subr.bf16.mxu0 0
    %196 = vmatpush1.bf16.xpose.msra.mxu0 %v175
    %197 = vmatprep.subr.bf16.mxu0 0
    %198 = vmatpush1.bf16.xpose.msra.mxu0 %v176
    %199 = vmatprep.subr.bf16.mxu0 0
    %200 = vmatpush1.bf16.xpose.msra.mxu0 %v177
    %201 = vmatprep.subr.bf16.mxu0 0
    %202 = vmatpush1.bf16.xpose.msra.mxu0 %v178
    %203 = vmatprep.subr.bf16.mxu0 0
    %204 = vmatpush1.bf16.xpose.msra.mxu0 0
    %205 = vmatprep.subr.bf16.mxu0 0
    %206 = vmatpush1.bf16.xpose.msra.mxu0 0
    %207 = vmatprep.subr.bf16.mxu0 0
    %208 = vmatpush1.bf16.xpose.msra.mxu0 0
    %209 = vmatprep.subr.bf16.mxu0 0
    %210 = vmatpush1.bf16.xpose.msra.mxu0 0
    %211 = vmatprep.subr.bf16.mxu0 0
    %212 = vmatpush1.bf16.xpose.msra.mxu0 0
    %213 = vmatprep.subr.bf16.mxu0 0
    %214 = vmatpush1.bf16.xpose.msra.mxu0 0
    %215 = vmatprep.subr.bf16.mxu0 0
    %216 = vmatpush1.bf16.xpose.msra.mxu0 0
    %217 = vmatprep.subr.bf16.mxu0 0
    %218 = vmatpush1.bf16.xpose.msra.mxu0 0
    %219 = vmatprep.mubr.bf16.mxu0 0
    %220 = vmatmul.mubr.bf16.gmra.mrb[0].mxu0 %v123
    %v221 = vpop.f32.mrb[0].mxu0
    %v222 = vadd.f32 0.0, %v221
    %v223 = vpop.f32.mrb[0].mxu0
    %v224 = vpop.f32.mrb[0].mxu0
    %v225 = vadd.f32 0.0, %v224
    %v226 = vpop.f32.mrb[0].mxu0
    %227 = vmatprep.mubr.bf16.mxu0 0
    %228 = vmatmul.mubr.bf16.gmra.mrb[0].mxu0 %v124
    %v229 = vpop.f32.mrb[0].mxu0
    %v230 = vadd.f32 0.0, %v229
    %v231 = vpop.f32.mrb[0].mxu0
    %v232 = vpop.f32.mrb[0].mxu0
    %v233 = vadd.f32 0.0, %v232
    %v234 = vpop.f32.mrb[0].mxu0
    %235 = vmatprep.mubr.bf16.mxu0 0
    %236 = vmatmul.mubr.bf16.gmra.mrb[0].mxu0 %v125
    %v237 = vpop.f32.mrb[0].mxu0
    %v238 = vadd.f32 0.0, %v237
    %v239 = vpop.f32.mrb[0].mxu0
    %v240 = vpop.f32.mrb[0].mxu0
    %v241 = vadd.f32 0.0, %v240
    %v242 = vpop.f32.mrb[0].mxu0
    %243 = vmatprep.mubr.bf16.mxu0 0
    %244 = vmatmul.mubr.bf16.gmra.mrb[0].mxu0 %v126
    %v245 = vpop.f32.mrb[0].mxu0
    %v246 = vadd.f32 0.0, %v245
    %v247 = vpop.f32.mrb[0].mxu0
    %v248 = vpop.f32.mrb[0].mxu0
    %v249 = vadd.f32 0.0, %v248
    %v250 = vpop.f32.mrb[0].mxu0
    %251 = vmatprep.mubr.bf16.mxu0 0
    %252 = vmatmul.mubr.bf16.gmra.mrb[0].mxu0 %v127
    %v253 = vpop.f32.mrb[0].mxu0
    %v254 = vadd.f32 0.0, %v253
    %v255 = vpop.f32.mrb[0].mxu0
    %v256 = vpop.f32.mrb[0].mxu0
    %v257 = vadd.f32 0.0, %v256
    %v258 = vpop.f32.mrb[0].mxu0
    %259 = vmatprep.mubr.bf16.mxu0 0
    %260 = vmatmul.mubr.bf16.gmra.mrb[0].mxu0 %v128
    %v261 = vpop.f32.mrb[0].mxu0
    %v262 = vadd.f32 0.0, %v261
    %v263 = vpop.f32.mrb[0].mxu0
    %v264 = vpop.f32.mrb[0].mxu0
    %v265 = vadd.f32 0.0, %v264
    %v266 = vpop.f32.mrb[0].mxu0
    %267 = vmatprep.mubr.bf16.mxu0 0
    %268 = vmatmul.mubr.bf16.gmra.mrb[0].mxu0 %v129
    %v269 = vpop.f32.mrb[0].mxu0
    %v270 = vadd.f32 0.0, %v269
    %v271 = vpop.f32.mrb[0].mxu0
    %v272 = vpop.f32.mrb[0].mxu0
    %v273 = vadd.f32 0.0, %v272
    %v274 = vpop.f32.mrb[0].mxu0
    %275 = vmatprep.mubr.bf16.mxu0 0
    %276 = vmatmul.mubr.bf16.gmra.mrb[0].mxu0 %v130
    %v277 = vpop.f32.mrb[0].mxu0
    %v278 = vadd.f32 0.0, %v277
    %v279 = vpop.f32.mrb[0].mxu0
    %v280 = vpop.f32.mrb[0].mxu0
    %v281 = vadd.f32 0.0, %v280
    %v282 = vpop.f32.mrb[0].mxu0
    %283 = vdwg.mxu0
    %v284 = vmul.f32 %v222, 14.285714
    %v285 = vmul.f32 %v225, 14.285714
    %v286 = vmul.f32 %v230, 14.285714
    %v287 = vmul.f32 %v233, 14.285714
    %v288 = vmul.f32 %v238, 14.285714
    %v289 = vmul.f32 %v241, 14.285714
    %v290 = vmul.f32 %v246, 14.285714
    %v291 = vmul.f32 %v249, 14.285714
    %v292 = vmul.f32 %v254, 14.285714
    %v293 = vmul.f32 %v257, 14.285714
    %v294 = vmul.f32 %v262, 14.285714
    %v295 = vmul.f32 %v265, 14.285714
    %v296 = vmul.f32 %v270, 14.285714
    %v297 = vmul.f32 %v273, 14.285714
    %v298 = vmul.f32 %v278, 14.285714
    %v299 = vmul.f32 %v281, 14.285714
    %v300 = vld [vmem:[%s0] sm:$0xff]
    %v301 = vld [vmem:[%s0 + $0x8] sm:$0xff]
    %v302 = vld [vmem:[%s0 + $0x10] sm:$0xff]
    %v303 = vld [vmem:[%s0 + $0x18] sm:$0xff]
    %v304 = vld [vmem:[%s0 + $0x20] sm:$0xff]
    %v305 = vld [vmem:[%s0 + $0x28] sm:$0xff]
    %v306 = vld [vmem:[%s0 + $0x30] sm:$0xff]
    %v307 = vld [vmem:[%s0 + $0x38] sm:$0xff]
    %v308 = vld [vmem:[%s0 + $0x40] sm:$0xff]
    %v309 = vld [vmem:[%s0 + $0x48] sm:$0xff]
    %v310 = vld [vmem:[%s0 + $0x50] sm:$0xff]
    %v311 = vld [vmem:[%s0 + $0x58] sm:$0xff]
    %v312 = vld [vmem:[%s0 + $0x60] sm:$0xff]
    %v313 = vld [vmem:[%s0 + $0x68] sm:$0xff]
    %v314 = vld [vmem:[%s0 + $0x70] sm:$0xff]
    %v315 = vld [vmem:[%s0 + $0x78] sm:$0xff]
    %v316 = vld [vmem:[%s1] sm:$0x1]
    %317 = vset.pattern.permute.xlu0 0
    %318 = vperm.xlu0 %317, %v300
    %v319 = vpop.permute.xlu0 %318
    %320 = vset.pattern.permute.xlu0 0
    %321 = vperm.xlu0 %320, %v301
    %v322 = vpop.permute.xlu0 %321
    %323 = vset.pattern.permute.xlu0 0
    %324 = vperm.xlu0 %323, %v302
    %v325 = vpop.permute.xlu0 %324
    %326 = vset.pattern.permute.xlu0 0
    %327 = vperm.xlu0 %326, %v303
    %v328 = vpop.permute.xlu0 %327
    %329 = vset.pattern.permute.xlu0 0
    %330 = vperm.xlu0 %329, %v304
    %v331 = vpop.permute.xlu0 %330
    %332 = vset.pattern.permute.xlu0 0
    %333 = vperm.xlu0 %332, %v305
    %v334 = vpop.permute.xlu0 %333
    %335 = vset.pattern.permute.xlu0 0
    %336 = vperm.xlu0 %335, %v306
    %v337 = vpop.permute.xlu0 %336
    %338 = vset.pattern.permute.xlu0 0
    %339 = vperm.xlu0 %338, %v307
    %v340 = vpop.permute.xlu0 %339
    %341 = vset.pattern.permute.xlu0 0
    %342 = vperm.xlu0 %341, %v308
    %v343 = vpop.permute.xlu0 %342
    %344 = vset.pattern.permute.xlu0 0
    %345 = vperm.xlu0 %344, %v309
    %v346 = vpop.permute.xlu0 %345
    %347 = vset.pattern.permute.xlu0 0
    %348 = vperm.xlu0 %347, %v310
    %v349 = vpop.permute.xlu0 %348
    %350 = vset.pattern.permute.xlu0 0
    %351 = vperm.xlu0 %350, %v311
    %v352 = vpop.permute.xlu0 %351
    %353 = vset.pattern.permute.xlu0 0
    %354 = vperm.xlu0 %353, %v312
    %v355 = vpop.permute.xlu0 %354
    %356 = vset.pattern.permute.xlu0 0
    %357 = vperm.xlu0 %356, %v313
    %v358 = vpop.permute.xlu0 %357
    %359 = vset.pattern.permute.xlu0 0
    %360 = vperm.xlu0 %359, %v314
    %v361 = vpop.permute.xlu0 %360
    %362 = vset.pattern.permute.xlu0 0
    %363 = vperm.xlu0 %362, %v315
    %v364 = vpop.permute.xlu0 %363
    %v365 = vlaneseq
    %v366 = vshrl.u32 %v365, 7
    %v367 = vsub.s32 0, %v366
    %v368 = vrot.slane %v316, %v367
    %vm369 = vcmp.eq.s32.totalorder %v319, %v368
    %vm370 = vcmp.eq.s32.totalorder %v322, %v368
    %vm371 = vcmp.eq.s32.totalorder %v325, %v368
    %vm372 = vcmp.eq.s32.totalorder %v328, %v368
    %vm373 = vcmp.eq.s32.totalorder %v331, %v368
    %vm374 = vcmp.eq.s32.totalorder %v334, %v368
    %vm375 = vcmp.eq.s32.totalorder %v337, %v368
    %vm376 = vcmp.eq.s32.totalorder %v340, %v368
    %vm377 = vcmp.eq.s32.totalorder %v343, %v368
    %vm378 = vcmp.eq.s32.totalorder %v346, %v368
    %vm379 = vcmp.eq.s32.totalorder %v349, %v368
    %vm380 = vcmp.eq.s32.totalorder %v352, %v368
    %vm381 = vcmp.eq.s32.totalorder %v355, %v368
    %vm382 = vcmp.eq.s32.totalorder %v358, %v368
    %vm383 = vcmp.eq.s32.totalorder %v361, %v368
    %vm384 = vcmp.eq.s32.totalorder %v364, %v368
    %s385 = smul.u32 0, 128
    %s386 = sadd.s32 0, 1
    %s387 = smul.u32 %s386, 128
    %p388 = scmp.lt.s32.totalorder %s385, %s387
    %s389 = smul.u32 0, 128
    %s390 = sadd.s32 0, 1
    %s391 = smul.u32 %s390, 128
    %p392 = scmp.lt.s32.totalorder %s389, %s391
    %p393 = pnand %p388, %p392
    %p394 = pneg %p393
    %p395 = scmp.gt.s32.totalorder %s387, 8
    %p396 = por %p394, %p395
    // Predicated region
    $region26: #{tpu_custom_call.1} parent=1 // pred_check
      %p397 = pneg %p396
    $region27: #{tpu_custom_call.1} parent=1 // pred_check_branch
      %399 = sbr.rel (%p397) target = $region29
    $region28: #{tpu_custom_call.1} parent=1 // pred_region
      %v400 = vlaneseq
      %v401 = vshrl.u32 %v400, 7
      %v402 = vadd.s32 %v401, 8
      %v403 = vadd.s32 %v401, 16
      %v404 = vadd.s32 %v401, 24
      %v405 = vadd.s32 %v401, 32
      %v406 = vadd.s32 %v401, 40
      %v407 = vadd.s32 %v401, 48
      %v408 = vadd.s32 %v401, 56
      %v409 = vadd.s32 %v401, 64
      %v410 = vadd.s32 %v401, 72
      %v411 = vadd.s32 %v401, 80
      %v412 = vadd.s32 %v401, 88
      %v413 = vadd.s32 %v401, 96
      %v414 = vadd.s32 %v401, 104
      %v415 = vadd.s32 %v401, 112
      %v416 = vadd.s32 %v401, 120
      %v417 = vstv %s385
      %v418 = vadd.s32 %v417, %v401
      %v419 = vadd.s32 %v417, %v402
      %v420 = vadd.s32 %v417, %v403
      %v421 = vadd.s32 %v417, %v404
      %v422 = vadd.s32 %v417, %v405
      %v423 = vadd.s32 %v417, %v406
      %v424 = vadd.s32 %v417, %v407
      %v425 = vadd.s32 %v417, %v408
      %v426 = vadd.s32 %v417, %v409
      %v427 = vadd.s32 %v417, %v410
      %v428 = vadd.s32 %v417, %v411
      %v429 = vadd.s32 %v417, %v412
      %v430 = vadd.s32 %v417, %v413
      %v431 = vadd.s32 %v417, %v414
      %v432 = vadd.s32 %v417, %v415
      %v433 = vadd.s32 %v417, %v416
      %v434 = vlaneseq
      %v435 = vand.u32 %v434, 127
      %v436 = vstv %s389
      %v437 = vadd.s32 %v436, %v435
      %vm438 = vcmp.ne.s32.totalorder %v418, %v437
      %vm439 = vcmp.ne.s32.totalorder %v419, %v437
      %vm440 = vcmp.ne.s32.totalorder %v420, %v437
      %vm441 = vcmp.ne.s32.totalorder %v421, %v437
      %vm442 = vcmp.ne.s32.totalorder %v422, %v437
      %vm443 = vcmp.ne.s32.totalorder %v423, %v437
      %vm444 = vcmp.ne.s32.totalorder %v424, %v437
      %vm445 = vcmp.ne.s32.totalorder %v425, %v437
      %vm446 = vcmp.ne.s32.totalorder %v426, %v437
      %vm447 = vcmp.ne.s32.totalorder %v427, %v437
      %vm448 = vcmp.ne.s32.totalorder %v428, %v437
      %vm449 = vcmp.ne.s32.totalorder %v429, %v437
      %vm450 = vcmp.ne.s32.totalorder %v430, %v437
      %vm451 = vcmp.ne.s32.totalorder %v431, %v437
      %vm452 = vcmp.ne.s32.totalorder %v432, %v437
      %vm453 = vcmp.ne.s32.totalorder %v433, %v437
      %vm454 = vcmp.lt.s32.totalorder %v437, 8
      %vm455 = vmand %vm438, %vm454
      %vm456 = vmand %vm439, %vm454
      %vm457 = vmand %vm440, %vm454
      %vm458 = vmand %vm441, %vm454
      %vm459 = vmand %vm442, %vm454
      %vm460 = vmand %vm443, %vm454
      %vm461 = vmand %vm444, %vm454
      %vm462 = vmand %vm445, %vm454
      %vm463 = vmand %vm446, %vm454
      %vm464 = vmand %vm447, %vm454
      %vm465 = vmand %vm448, %vm454
      %vm466 = vmand %vm449, %vm454
      %vm467 = vmand %vm450, %vm454
      %vm468 = vmand %vm451, %vm454
      %vm469 = vmand %vm452, %vm454
      %vm470 = vmand %vm453, %vm454
      %v471 = vld [vmem:[#allocation2] sm:$0xff]
      %v472 = vld [vmem:[#allocation2 + $0x8] sm:$0xff]
      %v473 = vld [vmem:[#allocation2 + $0x10] sm:$0xff]
      %v474 = vld [vmem:[#allocation2 + $0x18] sm:$0xff]
      %v475 = vld [vmem:[#allocation2 + $0x20] sm:$0xff]
      %v476 = vld [vmem:[#allocation2 + $0x28] sm:$0xff]
      %v477 = vld [vmem:[#allocation2 + $0x30] sm:$0xff]
      %v478 = vld [vmem:[#allocation2 + $0x38] sm:$0xff]
      %v479 = vld [vmem:[#allocation2 + $0x40] sm:$0xff]
      %v480 = vld [vmem:[#allocation2 + $0x48] sm:$0xff]
      %v481 = vld [vmem:[#allocation2 + $0x50] sm:$0xff]
      %v482 = vld [vmem:[#allocation2 + $0x58] sm:$0xff]
      %v483 = vld [vmem:[#allocation2 + $0x60] sm:$0xff]
      %v484 = vld [vmem:[#allocation2 + $0x68] sm:$0xff]
      %v485 = vld [vmem:[#allocation2 + $0x70] sm:$0xff]
      %v486 = vld [vmem:[#allocation2 + $0x78] sm:$0xff]
      %v487 = vsub.f32 %v284, 14.285714
      %v488 = vsub.f32 %v285, 14.285714
      %v489 = vsub.f32 %v286, 14.285714
      %v490 = vsub.f32 %v287, 14.285714
      %v491 = vsub.f32 %v288, 14.285714
      %v492 = vsub.f32 %v289, 14.285714
      %v493 = vsub.f32 %v290, 14.285714
      %v494 = vsub.f32 %v291, 14.285714
      %v495 = vsub.f32 %v292, 14.285714
      %v496 = vsub.f32 %v293, 14.285714
      %v497 = vsub.f32 %v294, 14.285714
      %v498 = vsub.f32 %v295, 14.285714
      %v499 = vsub.f32 %v296, 14.285714
      %v500 = vsub.f32 %v297, 14.285714
      %v501 = vsub.f32 %v298, 14.285714
      %v502 = vsub.f32 %v299, 14.285714
      %v503 = vmul.f32 %v487, 1.442695
      %v504 = vpow.pop %v503
      %v505 = vmul.f32 %v488, 1.442695
      %v506 = vpow.pop %v505
      %v507 = vmul.f32 %v489, 1.442695
      %v508 = vpow.pop %v507
      %v509 = vmul.f32 %v490, 1.442695
      %v510 = vpow.pop %v509
      %v511 = vmul.f32 %v491, 1.442695
      %v512 = vpow.pop %v511
      %v513 = vmul.f32 %v492, 1.442695
      %v514 = vpow.pop %v513
      %v515 = vmul.f32 %v493, 1.442695
      %v516 = vpow.pop %v515
      %v517 = vmul.f32 %v494, 1.442695
      %v518 = vpow.pop %v517
      %v519 = vmul.f32 %v495, 1.442695
      %v520 = vpow.pop %v519
      %v521 = vmul.f32 %v496, 1.442695
      %v522 = vpow.pop %v521
      %v523 = vmul.f32 %v497, 1.442695
      %v524 = vpow.pop %v523
      %v525 = vmul.f32 %v498, 1.442695
      %v526 = vpow.pop %v525
      %v527 = vmul.f32 %v499, 1.442695
      %v528 = vpow.pop %v527
      %v529 = vmul.f32 %v500, 1.442695
      %v530 = vpow.pop %v529
      %v531 = vmul.f32 %v501, 1.442695
      %v532 = vpow.pop %v531
      %v533 = vmul.f32 %v502, 1.442695
      %v534 = vpow.pop %v533
      %v535 = vsel %vm455, %v504, 0.0
      %v536 = vsel %vm456, %v506, 0.0
      %v537 = vsel %vm457, %v508, 0.0
      %v538 = vsel %vm458, %v510, 0.0
      %v539 = vsel %vm459, %v512, 0.0
      %v540 = vsel %vm460, %v514, 0.0
      %v541 = vsel %vm461, %v516, 0.0
      %v542 = vsel %vm462, %v518, 0.0
      %v543 = vsel %vm463, %v520, 0.0
      %v544 = vsel %vm464, %v522, 0.0
      %v545 = vsel %vm465, %v524, 0.0
      %v546 = vsel %vm466, %v526, 0.0
      %v547 = vsel %vm467, %v528, 0.0
      %v548 = vsel %vm468, %v530, 0.0
      %v549 = vsel %vm469, %v532, 0.0
      %v550 = vsel %vm470, %v534, 0.0
      %551 = vadd.xlane.f32.xlu0 %v535
      %v552 = vpop.xlane.xlu0 %551
      %553 = vadd.xlane.f32.xlu0 %v536
      %v554 = vpop.xlane.xlu0 %553
      %555 = vadd.xlane.f32.xlu0 %v537
      %v556 = vpop.xlane.xlu0 %555
      %557 = vadd.xlane.f32.xlu0 %v538
      %v558 = vpop.xlane.xlu0 %557
      %559 = vadd.xlane.f32.xlu0 %v539
      %v560 = vpop.xlane.xlu0 %559
      %561 = vadd.xlane.f32.xlu0 %v540
      %v562 = vpop.xlane.xlu0 %561
      %563 = vadd.xlane.f32.xlu0 %v541
      %v564 = vpop.xlane.xlu0 %563
      %565 = vadd.xlane.f32.xlu0 %v542
      %v566 = vpop.xlane.xlu0 %565
      %567 = vadd.xlane.f32.xlu0 %v543
      %v568 = vpop.xlane.xlu0 %567
      %569 = vadd.xlane.f32.xlu0 %v544
      %v570 = vpop.xlane.xlu0 %569
      %571 = vadd.xlane.f32.xlu0 %v545
      %v572 = vpop.xlane.xlu0 %571
      %573 = vadd.xlane.f32.xlu0 %v546
      %v574 = vpop.xlane.xlu0 %573
      %575 = vadd.xlane.f32.xlu0 %v547
      %v576 = vpop.xlane.xlu0 %575
      %577 = vadd.xlane.f32.xlu0 %v548
      %v578 = vpop.xlane.xlu0 %577
      %579 = vadd.xlane.f32.xlu0 %v549
      %v580 = vpop.xlane.xlu0 %579
      %581 = vadd.xlane.f32.xlu0 %v550
      %v582 = vpop.xlane.xlu0 %581
      %v583 = vadd.f32 %v471, %v552
      %v584 = vadd.f32 %v472, %v554
      %v585 = vadd.f32 %v473, %v556
      %v586 = vadd.f32 %v474, %v558
      %v587 = vadd.f32 %v475, %v560
      %v588 = vadd.f32 %v476, %v562
      %v589 = vadd.f32 %v477, %v564
      %v590 = vadd.f32 %v478, %v566
      %v591 = vadd.f32 %v479, %v568
      %v592 = vadd.f32 %v480, %v570
      %v593 = vadd.f32 %v481, %v572
      %v594 = vadd.f32 %v482, %v574
      %v595 = vadd.f32 %v483, %v576
      %v596 = vadd.f32 %v484, %v578
      %v597 = vadd.f32 %v485, %v580
      %v598 = vadd.f32 %v486, %v582
      %vm599 = vcmask 7168
      %600 = vst.msk [vmem:[#allocation2] sm:$0xff] %vm599, %v583
      %601 = vst.msk [vmem:[#allocation2 + $0x8] sm:$0xff] %vm599, %v584
      %602 = vst.msk [vmem:[#allocation2 + $0x10] sm:$0xff] %vm599, %v585
      %603 = vst.msk [vmem:[#allocation2 + $0x18] sm:$0xff] %vm599, %v586
      %604 = vst.msk [vmem:[#allocation2 + $0x20] sm:$0xff] %vm599, %v587
      %605 = vst.msk [vmem:[#allocation2 + $0x28] sm:$0xff] %vm599, %v588
      %606 = vst.msk [vmem:[#allocation2 + $0x30] sm:$0xff] %vm599, %v589
      %607 = vst.msk [vmem:[#allocation2 + $0x38] sm:$0xff] %vm599, %v590
      %608 = vst.msk [vmem:[#allocation2 + $0x40] sm:$0xff] %vm599, %v591
      %609 = vst.msk [vmem:[#allocation2 + $0x48] sm:$0xff] %vm599, %v592
      %610 = vst.msk [vmem:[#allocation2 + $0x50] sm:$0xff] %vm599, %v593
      %611 = vst.msk [vmem:[#allocation2 + $0x58] sm:$0xff] %vm599, %v594
      %612 = vst.msk [vmem:[#allocation2 + $0x60] sm:$0xff] %vm599, %v595
      %613 = vst.msk [vmem:[#allocation2 + $0x68] sm:$0xff] %vm599, %v596
      %614 = vst.msk [vmem:[#allocation2 + $0x70] sm:$0xff] %vm599, %v597
      %615 = vst.msk [vmem:[#allocation2 + $0x78] sm:$0xff] %vm599, %v598
      %v616 = vld [vmem:[#allocation3] sm:$0xff]
      %v617 = vld [vmem:[#allocation3 + $0x8] sm:$0xff]
      %v618 = vld [vmem:[#allocation3 + $0x10] sm:$0xff]
      %v619 = vld [vmem:[#allocation3 + $0x18] sm:$0xff]
      %v620 = vld [vmem:[#allocation3 + $0x20] sm:$0xff]
      %v621 = vld [vmem:[#allocation3 + $0x28] sm:$0xff]
      %v622 = vld [vmem:[#allocation3 + $0x30] sm:$0xff]
      %v623 = vld [vmem:[#allocation3 + $0x38] sm:$0xff]
      %v624 = vld [vmem:[#allocation3 + $0x40] sm:$0xff]
      %v625 = vld [vmem:[#allocation3 + $0x48] sm:$0xff]
      %v626 = vld [vmem:[#allocation3 + $0x50] sm:$0xff]
      %v627 = vld [vmem:[#allocation3 + $0x58] sm:$0xff]
      %v628 = vld [vmem:[#allocation3 + $0x60] sm:$0xff]
      %v629 = vld [vmem:[#allocation3 + $0x68] sm:$0xff]
      %v630 = vld [vmem:[#allocation3 + $0x70] sm:$0xff]
      %v631 = vld [vmem:[#allocation3 + $0x78] sm:$0xff]
      %vm632 = vmand %vm455, %vm369
      %vm633 = vmand %vm456, %vm370
      %vm634 = vmand %vm457, %vm371
      %vm635 = vmand %vm458, %vm372
      %vm636 = vmand %vm459, %vm373
      %vm637 = vmand %vm460, %vm374
      %vm638 = vmand %vm461, %vm375
      %vm639 = vmand %vm462, %vm376
      %vm640 = vmand %vm463, %vm377
      %vm641 = vmand %vm464, %vm378
      %vm642 = vmand %vm465, %vm379
      %vm643 = vmand %vm466, %vm380
      %vm644 = vmand %vm467, %vm381
      %vm645 = vmand %vm468, %vm382
      %vm646 = vmand %vm469, %vm383
      %vm647 = vmand %vm470, %vm384
      %v648 = vsel %vm632, %v284, 0.0
      %v649 = vsel %vm633, %v285, 0.0
      %v650 = vsel %vm634, %v286, 0.0
      %v651 = vsel %vm635, %v287, 0.0
      %v652 = vsel %vm636, %v288, 0.0
      %v653 = vsel %vm637, %v289, 0.0
      %v654 = vsel %vm638, %v290, 0.0
      %v655 = vsel %vm639, %v291, 0.0
      %v656 = vsel %vm640, %v292, 0.0
      %v657 = vsel %vm641, %v293, 0.0
      %v658 = vsel %vm642, %v294, 0.0
      %v659 = vsel %vm643, %v295, 0.0
      %v660 = vsel %vm644, %v296, 0.0
      %v661 = vsel %vm645, %v297, 0.0
      %v662 = vsel %vm646, %v298, 0.0
      %v663 = vsel %vm647, %v299, 0.0
      %664 = vadd.xlane.f32.xlu0 %v648
      %v665 = vpop.xlane.xlu0 %664
      %666 = vadd.xlane.f32.xlu0 %v649
      %v667 = vpop.xlane.xlu0 %666
      %668 = vadd.xlane.f32.xlu0 %v650
      %v669 = vpop.xlane.xlu0 %668
      %670 = vadd.xlane.f32.xlu0 %v651
      %v671 = vpop.xlane.xlu0 %670
      %672 = vadd.xlane.f32.xlu0 %v652
      %v673 = vpop.xlane.xlu0 %672
      %674 = vadd.xlane.f32.xlu0 %v653
      %v675 = vpop.xlane.xlu0 %674
      %676 = vadd.xlane.f32.xlu0 %v654
      %v677 = vpop.xlane.xlu0 %676
      %678 = vadd.xlane.f32.xlu0 %v655
      %v679 = vpop.xlane.xlu0 %678
      %680 = vadd.xlane.f32.xlu0 %v656
      %v681 = vpop.xlane.xlu0 %680
      %682 = vadd.xlane.f32.xlu0 %v657
      %v683 = vpop.xlane.xlu0 %682
      %684 = vadd.xlane.f32.xlu0 %v658
      %v685 = vpop.xlane.xlu0 %684
      %686 = vadd.xlane.f32.xlu0 %v659
      %v687 = vpop.xlane.xlu0 %686
      %688 = vadd.xlane.f32.xlu0 %v660
      %v689 = vpop.xlane.xlu0 %688
      %690 = vadd.xlane.f32.xlu0 %v661
      %v691 = vpop.xlane.xlu0 %690
      %692 = vadd.xlane.f32.xlu0 %v662
      %v693 = vpop.xlane.xlu0 %692
      %694 = vadd.xlane.f32.xlu0 %v663
      %v695 = vpop.xlane.xlu0 %694
      %v696 = vadd.f32 %v616, %v665
      %v697 = vadd.f32 %v617, %v667
      %v698 = vadd.f32 %v618, %v669
      %v699 = vadd.f32 %v619, %v671
      %v700 = vadd.f32 %v620, %v673
      %v701 = vadd.f32 %v621, %v675
      %v702 = vadd.f32 %v622, %v677
      %v703 = vadd.f32 %v623, %v679
      %v704 = vadd.f32 %v624, %v681
      %v705 = vadd.f32 %v625, %v683
      %v706 = vadd.f32 %v626, %v685
      %v707 = vadd.f32 %v627, %v687
      %v708 = vadd.f32 %v628, %v689
      %v709 = vadd.f32 %v629, %v691
      %v710 = vadd.f32 %v630, %v693
      %v711 = vadd.f32 %v631, %v695
      %712 = vst.msk [vmem:[#allocation3] sm:$0xff] %vm599, %v696
      %713 = vst.msk [vmem:[#allocation3 + $0x8] sm:$0xff] %vm599, %v697
      %714 = vst.msk [vmem:[#allocation3 + $0x10] sm:$0xff] %vm599, %v698
      %715 = vst.msk [vmem:[#allocation3 + $0x18] sm:$0xff] %vm599, %v699
      %716 = vst.msk [vmem:[#allocation3 + $0x20] sm:$0xff] %vm599, %v700
      %717 = vst.msk [vmem:[#allocation3 + $0x28] sm:$0xff] %vm599, %v701
      %718 = vst.msk [vmem:[#allocation3 + $0x30] sm:$0xff] %vm599, %v702
      %719 = vst.msk [vmem:[#allocation3 + $0x38] sm:$0xff] %vm599, %v703
      %720 = vst.msk [vmem:[#allocation3 + $0x40] sm:$0xff] %vm599, %v704
      %721 = vst.msk [vmem:[#allocation3 + $0x48] sm:$0xff] %vm599, %v705
      %722 = vst.msk [vmem:[#allocation3 + $0x50] sm:$0xff] %vm599, %v706
      %723 = vst.msk [vmem:[#allocation3 + $0x58] sm:$0xff] %vm599, %v707
      %724 = vst.msk [vmem:[#allocation3 + $0x60] sm:$0xff] %vm599, %v708
      %725 = vst.msk [vmem:[#allocation3 + $0x68] sm:$0xff] %vm599, %v709
      %726 = vst.msk [vmem:[#allocation3 + $0x70] sm:$0xff] %vm599, %v710
      %727 = vst.msk [vmem:[#allocation3 + $0x78] sm:$0xff] %vm599, %v711
    $region29: #{tpu_custom_call.1} parent=1 // pred_fallthru
      _
    %p728 = pneg %p396
    // Predicated region
    $region30: #{tpu_custom_call.1} parent=1 // pred_check
      _
    $region31: #{tpu_custom_call.1} parent=1 // pred_check_branch
      %730 = sbr.rel (%p396) target = $region33
    $region32: #{tpu_custom_call.1} parent=1 // pred_region
      %v731 = vld [vmem:[#allocation2] sm:$0xff]
      %v732 = vld [vmem:[#allocation2 + $0x8] sm:$0xff]
      %v733 = vld [vmem:[#allocation2 + $0x10] sm:$0xff]
      %v734 = vld [vmem:[#allocation2 + $0x18] sm:$0xff]
      %v735 = vld [vmem:[#allocation2 + $0x20] sm:$0xff]
      %v736 = vld [vmem:[#allocation2 + $0x28] sm:$0xff]
      %v737 = vld [vmem:[#allocation2 + $0x30] sm:$0xff]
      %v738 = vld [vmem:[#allocation2 + $0x38] sm:$0xff]
      %v739 = vld [vmem:[#allocation2 + $0x40] sm:$0xff]
      %v740 = vld [vmem:[#allocation2 + $0x48] sm:$0xff]
      %v741 = vld [vmem:[#allocation2 + $0x50] sm:$0xff]
      %v742 = vld [vmem:[#allocation2 + $0x58] sm:$0xff]
      %v743 = vld [vmem:[#allocation2 + $0x60] sm:$0xff]
      %v744 = vld [vmem:[#allocation2 + $0x68] sm:$0xff]
      %v745 = vld [vmem:[#allocation2 + $0x70] sm:$0xff]
      %v746 = vld [vmem:[#allocation2 + $0x78] sm:$0xff]
      %v747 = vsub.f32 %v284, 14.285714
      %v748 = vsub.f32 %v285, 14.285714
      %v749 = vsub.f32 %v286, 14.285714
      %v750 = vsub.f32 %v287, 14.285714
      %v751 = vsub.f32 %v288, 14.285714
      %v752 = vsub.f32 %v289, 14.285714
      %v753 = vsub.f32 %v290, 14.285714
      %v754 = vsub.f32 %v291, 14.285714
      %v755 = vsub.f32 %v292, 14.285714
      %v756 = vsub.f32 %v293, 14.285714
      %v757 = vsub.f32 %v294, 14.285714
      %v758 = vsub.f32 %v295, 14.285714
      %v759 = vsub.f32 %v296, 14.285714
      %v760 = vsub.f32 %v297, 14.285714
      %v761 = vsub.f32 %v298, 14.285714
      %v762 = vsub.f32 %v299, 14.285714
      %v763 = vmul.f32 %v747, 1.442695
      %v764 = vpow.pop %v763
      %v765 = vmul.f32 %v748, 1.442695
      %v766 = vpow.pop %v765
      %v767 = vmul.f32 %v749, 1.442695
      %v768 = vpow.pop %v767
      %v769 = vmul.f32 %v750, 1.442695
      %v770 = vpow.pop %v769
      %v771 = vmul.f32 %v751, 1.442695
      %v772 = vpow.pop %v771
      %v773 = vmul.f32 %v752, 1.442695
      %v774 = vpow.pop %v773
      %v775 = vmul.f32 %v753, 1.442695
      %v776 = vpow.pop %v775
      %v777 = vmul.f32 %v754, 1.442695
      %v778 = vpow.pop %v777
      %v779 = vmul.f32 %v755, 1.442695
      %v780 = vpow.pop %v779
      %v781 = vmul.f32 %v756, 1.442695
      %v782 = vpow.pop %v781
      %v783 = vmul.f32 %v757, 1.442695
      %v784 = vpow.pop %v783
      %v785 = vmul.f32 %v758, 1.442695
      %v786 = vpow.pop %v785
      %v787 = vmul.f32 %v759, 1.442695
      %v788 = vpow.pop %v787
      %v789 = vmul.f32 %v760, 1.442695
      %v790 = vpow.pop %v789
      %v791 = vmul.f32 %v761, 1.442695
      %v792 = vpow.pop %v791
      %v793 = vmul.f32 %v762, 1.442695
      %v794 = vpow.pop %v793
      %795 = vadd.xlane.f32.xlu0 %v764
      %v796 = vpop.xlane.xlu0 %795
      %797 = vadd.xlane.f32.xlu0 %v766
      %v798 = vpop.xlane.xlu0 %797
      %799 = vadd.xlane.f32.xlu0 %v768
      %v800 = vpop.xlane.xlu0 %799
      %801 = vadd.xlane.f32.xlu0 %v770
      %v802 = vpop.xlane.xlu0 %801
      %803 = vadd.xlane.f32.xlu0 %v772
      %v804 = vpop.xlane.xlu0 %803
      %805 = vadd.xlane.f32.xlu0 %v774
      %v806 = vpop.xlane.xlu0 %805
      %807 = vadd.xlane.f32.xlu0 %v776
      %v808 = vpop.xlane.xlu0 %807
      %809 = vadd.xlane.f32.xlu0 %v778
      %v810 = vpop.xlane.xlu0 %809
      %811 = vadd.xlane.f32.xlu0 %v780
      %v812 = vpop.xlane.xlu0 %811
      %813 = vadd.xlane.f32.xlu0 %v782
      %v814 = vpop.xlane.xlu0 %813
      %815 = vadd.xlane.f32.xlu0 %v784
      %v816 = vpop.xlane.xlu0 %815
      %817 = vadd.xlane.f32.xlu0 %v786
      %v818 = vpop.xlane.xlu0 %817
      %819 = vadd.xlane.f32.xlu0 %v788
      %v820 = vpop.xlane.xlu0 %819
      %821 = vadd.xlane.f32.xlu0 %v790
      %v822 = vpop.xlane.xlu0 %821
      %823 = vadd.xlane.f32.xlu0 %v792
      %v824 = vpop.xlane.xlu0 %823
      %825 = vadd.xlane.f32.xlu0 %v794
      %v826 = vpop.xlane.xlu0 %825
      %v827 = vadd.f32 %v731, %v796
      %v828 = vadd.f32 %v732, %v798
      %v829 = vadd.f32 %v733, %v800
      %v830 = vadd.f32 %v734, %v802
      %v831 = vadd.f32 %v735, %v804
      %v832 = vadd.f32 %v736, %v806
      %v833 = vadd.f32 %v737, %v808
      %v834 = vadd.f32 %v738, %v810
      %v835 = vadd.f32 %v739, %v812
      %v836 = vadd.f32 %v740, %v814
      %v837 = vadd.f32 %v741, %v816
      %v838 = vadd.f32 %v742, %v818
      %v839 = vadd.f32 %v743, %v820
      %v840 = vadd.f32 %v744, %v822
      %v841 = vadd.f32 %v745, %v824
      %v842 = vadd.f32 %v746, %v826
      %vm843 = vcmask 7168
      %844 = vst.msk [vmem:[#allocation2] sm:$0xff] %vm843, %v827
      %845 = vst.msk [vmem:[#allocation2 + $0x8] sm:$0xff] %vm843, %v828
      %846 = vst.msk [vmem:[#allocation2 + $0x10] sm:$0xff] %vm843, %v829
      %847 = vst.msk [vmem:[#allocation2 + $0x18] sm:$0xff] %vm843, %v830
      %848 = vst.msk [vmem:[#allocation2 + $0x20] sm:$0xff] %vm843, %v831
      %849 = vst.msk [vmem:[#allocation2 + $0x28] sm:$0xff] %vm843, %v832
      %850 = vst.msk [vmem:[#allocation2 + $0x30] sm:$0xff] %vm843, %v833
      %851 = vst.msk [vmem:[#allocation2 + $0x38] sm:$0xff] %vm843, %v834
      %852 = vst.msk [vmem:[#allocation2 + $0x40] sm:$0xff] %vm843, %v835
      %853 = vst.msk [vmem:[#allocation2 + $0x48] sm:$0xff] %vm843, %v836
      %854 = vst.msk [vmem:[#allocation2 + $0x50] sm:$0xff] %vm843, %v837
      %855 = vst.msk [vmem:[#allocation2 + $0x58] sm:$0xff] %vm843, %v838
      %856 = vst.msk [vmem:[#allocation2 + $0x60] sm:$0xff] %vm843, %v839
      %857 = vst.msk [vmem:[#allocation2 + $0x68] sm:$0xff] %vm843, %v840
      %858 = vst.msk [vmem:[#allocation2 + $0x70] sm:$0xff] %vm843, %v841
      %859 = vst.msk [vmem:[#allocation2 + $0x78] sm:$0xff] %vm843, %v842
      %v860 = vld [vmem:[#allocation3] sm:$0xff]
      %v861 = vld [vmem:[#allocation3 + $0x8] sm:$0xff]
      %v862 = vld [vmem:[#allocation3 + $0x10] sm:$0xff]
      %v863 = vld [vmem:[#allocation3 + $0x18] sm:$0xff]
      %v864 = vld [vmem:[#allocation3 + $0x20] sm:$0xff]
      %v865 = vld [vmem:[#allocation3 + $0x28] sm:$0xff]
      %v866 = vld [vmem:[#allocation3 + $0x30] sm:$0xff]
      %v867 = vld [vmem:[#allocation3 + $0x38] sm:$0xff]
      %v868 = vld [vmem:[#allocation3 + $0x40] sm:$0xff]
      %v869 = vld [vmem:[#allocation3 + $0x48] sm:$0xff]
      %v870 = vld [vmem:[#allocation3 + $0x50] sm:$0xff]
      %v871 = vld [vmem:[#allocation3 + $0x58] sm:$0xff]
      %v872 = vld [vmem:[#allocation3 + $0x60] sm:$0xff]
      %v873 = vld [vmem:[#allocation3 + $0x68] sm:$0xff]
      %v874 = vld [vmem:[#allocation3 + $0x70] sm:$0xff]
      %v875 = vld [vmem:[#allocation3 + $0x78] sm:$0xff]
      %v876 = vsel %vm369, %v284, 0.0
      %v877 = vsel %vm370, %v285, 0.0
      %v878 = vsel %vm371, %v286, 0.0
      %v879 = vsel %vm372, %v287, 0.0
      %v880 = vsel %vm373, %v288, 0.0
      %v881 = vsel %vm374, %v289, 0.0
      %v882 = vsel %vm375, %v290, 0.0
      %v883 = vsel %vm376, %v291, 0.0
      %v884 = vsel %vm377, %v292, 0.0
      %v885 = vsel %vm378, %v293, 0.0
      %v886 = vsel %vm379, %v294, 0.0
      %v887 = vsel %vm380, %v295, 0.0
      %v888 = vsel %vm381, %v296, 0.0
      %v889 = vsel %vm382, %v297, 0.0
      %v890 = vsel %vm383, %v298, 0.0
      %v891 = vsel %vm384, %v299, 0.0
      %892 = vadd.xlane.f32.xlu0 %v876
      %v893 = vpop.xlane.xlu0 %892
      %894 = vadd.xlane.f32.xlu0 %v877
      %v895 = vpop.xlane.xlu0 %894
      %896 = vadd.xlane.f32.xlu0 %v878
      %v897 = vpop.xlane.xlu0 %896
      %898 = vadd.xlane.f32.xlu0 %v879
      %v899 = vpop.xlane.xlu0 %898
      %900 = vadd.xlane.f32.xlu0 %v880
      %v901 = vpop.xlane.xlu0 %900
      %902 = vadd.xlane.f32.xlu0 %v881
      %v903 = vpop.xlane.xlu0 %902
      %904 = vadd.xlane.f32.xlu0 %v882
      %v905 = vpop.xlane.xlu0 %904
      %906 = vadd.xlane.f32.xlu0 %v883
      %v907 = vpop.xlane.xlu0 %906
      %908 = vadd.xlane.f32.xlu0 %v884
      %v909 = vpop.xlane.xlu0 %908
      %910 = vadd.xlane.f32.xlu0 %v885
      %v911 = vpop.xlane.xlu0 %910
      %912 = vadd.xlane.f32.xlu0 %v886
      %v913 = vpop.xlane.xlu0 %912
      %914 = vadd.xlane.f32.xlu0 %v887
      %v915 = vpop.xlane.xlu0 %914
      %916 = vadd.xlane.f32.xlu0 %v888
      %v917 = vpop.xlane.xlu0 %916
      %918 = vadd.xlane.f32.xlu0 %v889
      %v919 = vpop.xlane.xlu0 %918
      %920 = vadd.xlane.f32.xlu0 %v890
      %v921 = vpop.xlane.xlu0 %920
      %922 = vadd.xlane.f32.xlu0 %v891
      %v923 = vpop.xlane.xlu0 %922
      %v924 = vadd.f32 %v860, %v893
      %v925 = vadd.f32 %v861, %v895
      %v926 = vadd.f32 %v862, %v897
      %v927 = vadd.f32 %v863, %v899
      %v928 = vadd.f32 %v864, %v901
      %v929 = vadd.f32 %v865, %v903
      %v930 = vadd.f32 %v866, %v905
      %v931 = vadd.f32 %v867, %v907
      %v932 = vadd.f32 %v868, %v909
      %v933 = vadd.f32 %v869, %v911
      %v934 = vadd.f32 %v870, %v913
      %v935 = vadd.f32 %v871, %v915
      %v936 = vadd.f32 %v872, %v917
      %v937 = vadd.f32 %v873, %v919
      %v938 = vadd.f32 %v874, %v921
      %v939 = vadd.f32 %v875, %v923
      %940 = vst.msk [vmem:[#allocation3] sm:$0xff] %vm843, %v924
      %941 = vst.msk [vmem:[#allocation3 + $0x8] sm:$0xff] %vm843, %v925
      %942 = vst.msk [vmem:[#allocation3 + $0x10] sm:$0xff] %vm843, %v926
      %943 = vst.msk [vmem:[#allocation3 + $0x18] sm:$0xff] %vm843, %v927
      %944 = vst.msk [vmem:[#allocation3 + $0x20] sm:$0xff] %vm843, %v928
      %945 = vst.msk [vmem:[#allocation3 + $0x28] sm:$0xff] %vm843, %v929
      %946 = vst.msk [vmem:[#allocation3 + $0x30] sm:$0xff] %vm843, %v930
      %947 = vst.msk [vmem:[#allocation3 + $0x38] sm:$0xff] %vm843, %v931
      %948 = vst.msk [vmem:[#allocation3 + $0x40] sm:$0xff] %vm843, %v932
      %949 = vst.msk [vmem:[#allocation3 + $0x48] sm:$0xff] %vm843, %v933
      %950 = vst.msk [vmem:[#allocation3 + $0x50] sm:$0xff] %vm843, %v934
      %951 = vst.msk [vmem:[#allocation3 + $0x58] sm:$0xff] %vm843, %v935
      %952 = vst.msk [vmem:[#allocation3 + $0x60] sm:$0xff] %vm843, %v936
      %953 = vst.msk [vmem:[#allocation3 + $0x68] sm:$0xff] %vm843, %v937
      %954 = vst.msk [vmem:[#allocation3 + $0x70] sm:$0xff] %vm843, %v938
      %955 = vst.msk [vmem:[#allocation3 + $0x78] sm:$0xff] %vm843, %v939
    $region33: #{tpu_custom_call.1} parent=1 // pred_fallthru
      _
    // Predicated region
    $region34: #{tpu_custom_call.1} parent=1 // pred_check
      %p956 = pneg %p22
    $region35: #{tpu_custom_call.1} parent=1 // pred_check_branch
      %958 = sbr.rel (%p956) target = $region37
    $region36: #{tpu_custom_call.1} parent=1 // pred_region
      %v959 = vld [vmem:[#allocation2] sm:$0xff]
      %v960 = vld [vmem:[#allocation2 + $0x8] sm:$0xff]
      %v961 = vld [vmem:[#allocation2 + $0x10] sm:$0xff]
      %v962 = vld [vmem:[#allocation2 + $0x18] sm:$0xff]
      %v963 = vld [vmem:[#allocation2 + $0x20] sm:$0xff]
      %v964 = vld [vmem:[#allocation2 + $0x28] sm:$0xff]
      %v965 = vld [vmem:[#allocation2 + $0x30] sm:$0xff]
      %v966 = vld [vmem:[#allocation2 + $0x38] sm:$0xff]
      %v967 = vld [vmem:[#allocation2 + $0x40] sm:$0xff]
      %v968 = vld [vmem:[#allocation2 + $0x48] sm:$0xff]
      %v969 = vld [vmem:[#allocation2 + $0x50] sm:$0xff]
      %v970 = vld [vmem:[#allocation2 + $0x58] sm:$0xff]
      %v971 = vld [vmem:[#allocation2 + $0x60] sm:$0xff]
      %v972 = vld [vmem:[#allocation2 + $0x68] sm:$0xff]
      %v973 = vld [vmem:[#allocation2 + $0x70] sm:$0xff]
      %v974 = vld [vmem:[#allocation2 + $0x78] sm:$0xff]
      %v975 = vlog2.pop %v959
      %v976 = vmul.f32 %v975, 0.6931472
      %v977 = vlog2.pop %v960
      %v978 = vmul.f32 %v977, 0.6931472
      %v979 = vlog2.pop %v961
      %v980 = vmul.f32 %v979, 0.6931472
      %v981 = vlog2.pop %v962
      %v982 = vmul.f32 %v981, 0.6931472
      %v983 = vlog2.pop %v963
      %v984 = vmul.f32 %v983, 0.6931472
      %v985 = vlog2.pop %v964
      %v986 = vmul.f32 %v985, 0.6931472
      %v987 = vlog2.pop %v965
      %v988 = vmul.f32 %v987, 0.6931472
      %v989 = vlog2.pop %v966
      %v990 = vmul.f32 %v989, 0.6931472
      %v991 = vlog2.pop %v967
      %v992 = vmul.f32 %v991, 0.6931472
      %v993 = vlog2.pop %v968
      %v994 = vmul.f32 %v993, 0.6931472
      %v995 = vlog2.pop %v969
      %v996 = vmul.f32 %v995, 0.6931472
      %v997 = vlog2.pop %v970
      %v998 = vmul.f32 %v997, 0.6931472
      %v999 = vlog2.pop %v971
      %v1000 = vmul.f32 %v999, 0.6931472
      %v1001 = vlog2.pop %v972
      %v1002 = vmul.f32 %v1001, 0.6931472
      %v1003 = vlog2.pop %v973
      %v1004 = vmul.f32 %v1003, 0.6931472
      %v1005 = vlog2.pop %v974
      %v1006 = vmul.f32 %v1005, 0.6931472
      %v1007 = vadd.f32 %v976, 14.285714
      %v1008 = vadd.f32 %v978, 14.285714
      %v1009 = vadd.f32 %v980, 14.285714
      %v1010 = vadd.f32 %v982, 14.285714
      %v1011 = vadd.f32 %v984, 14.285714
      %v1012 = vadd.f32 %v986, 14.285714
      %v1013 = vadd.f32 %v988, 14.285714
      %v1014 = vadd.f32 %v990, 14.285714
      %v1015 = vadd.f32 %v992, 14.285714
      %v1016 = vadd.f32 %v994, 14.285714
      %v1017 = vadd.f32 %v996, 14.285714
      %v1018 = vadd.f32 %v998, 14.285714
      %v1019 = vadd.f32 %v1000, 14.285714
      %v1020 = vadd.f32 %v1002, 14.285714
      %v1021 = vadd.f32 %v1004, 14.285714
      %v1022 = vadd.f32 %v1006, 14.285714
      %v1023 = vld [vmem:[#allocation3] sm:$0xff]
      %v1024 = vld [vmem:[#allocation3 + $0x8] sm:$0xff]
      %v1025 = vld [vmem:[#allocation3 + $0x10] sm:$0xff]
      %v1026 = vld [vmem:[#allocation3 + $0x18] sm:$0xff]
      %v1027 = vld [vmem:[#allocation3 + $0x20] sm:$0xff]
      %v1028 = vld [vmem:[#allocation3 + $0x28] sm:$0xff]
      %v1029 = vld [vmem:[#allocation3 + $0x30] sm:$0xff]
      %v1030 = vld [vmem:[#allocation3 + $0x38] sm:$0xff]
      %v1031 = vld [vmem:[#allocation3 + $0x40] sm:$0xff]
      %v1032 = vld [vmem:[#allocation3 + $0x48] sm:$0xff]
      %v1033 = vld [vmem:[#allocation3 + $0x50] sm:$0xff]
      %v1034 = vld [vmem:[#allocation3 + $0x58] sm:$0xff]
      %v1035 = vld [vmem:[#allocation3 + $0x60] sm:$0xff]
      %v1036 = vld [vmem:[#allocation3 + $0x68] sm:$0xff]
      %v1037 = vld [vmem:[#allocation3 + $0x70] sm:$0xff]
      %v1038 = vld [vmem:[#allocation3 + $0x78] sm:$0xff]
      %v1039 = vld [vmem:[%s2] sm:$0xff]
      %v1040 = vld [vmem:[%s2 + $0x8] sm:$0xff]
      %v1041 = vld [vmem:[%s2 + $0x10] sm:$0xff]
      %v1042 = vld [vmem:[%s2 + $0x18] sm:$0xff]
      %v1043 = vld [vmem:[%s2 + $0x20] sm:$0xff]
      %v1044 = vld [vmem:[%s2 + $0x28] sm:$0xff]
      %v1045 = vld [vmem:[%s2 + $0x30] sm:$0xff]
      %v1046 = vld [vmem:[%s2 + $0x38] sm:$0xff]
      %v1047 = vld [vmem:[%s2 + $0x40] sm:$0xff]
      %v1048 = vld [vmem:[%s2 + $0x48] sm:$0xff]
      %v1049 = vld [vmem:[%s2 + $0x50] sm:$0xff]
      %v1050 = vld [vmem:[%s2 + $0x58] sm:$0xff]
      %v1051 = vld [vmem:[%s2 + $0x60] sm:$0xff]
      %v1052 = vld [vmem:[%s2 + $0x68] sm:$0xff]
      %v1053 = vld [vmem:[%s2 + $0x70] sm:$0xff]
      %v1054 = vld [vmem:[%s2 + $0x78] sm:$0xff]
      %v1055 = vrcp.pop %v1039
      %v1056 = vmul.f32 %v1023, %v1055
      %v1057 = vrcp.pop %v1040
      %v1058 = vmul.f32 %v1024, %v1057
      %v1059 = vrcp.pop %v1041
      %v1060 = vmul.f32 %v1025, %v1059
      %v1061 = vrcp.pop %v1042
      %v1062 = vmul.f32 %v1026, %v1061
      %v1063 = vrcp.pop %v1043
      %v1064 = vmul.f32 %v1027, %v1063
      %v1065 = vrcp.pop %v1044
      %v1066 = vmul.f32 %v1028, %v1065
      %v1067 = vrcp.pop %v1045
      %v1068 = vmul.f32 %v1029, %v1067
      %v1069 = vrcp.pop %v1046
      %v1070 = vmul.f32 %v1030, %v1069
      %v1071 = vrcp.pop %v1047
      %v1072 = vmul.f32 %v1031, %v1071
      %v1073 = vrcp.pop %v1048
      %v1074 = vmul.f32 %v1032, %v1073
      %v1075 = vrcp.pop %v1049
      %v1076 = vmul.f32 %v1033, %v1075
      %v1077 = vrcp.pop %v1050
      %v1078 = vmul.f32 %v1034, %v1077
      %v1079 = vrcp.pop %v1051
      %v1080 = vmul.f32 %v1035, %v1079
      %v1081 = vrcp.pop %v1052
      %v1082 = vmul.f32 %v1036, %v1081
      %v1083 = vrcp.pop %v1053
      %v1084 = vmul.f32 %v1037, %v1083
      %v1085 = vrcp.pop %v1054
      %v1086 = vmul.f32 %v1038, %v1085
      %v1087 = vsub.f32 %v1056, %v1007
      %v1088 = vsub.f32 %v1058, %v1008
      %v1089 = vsub.f32 %v1060, %v1009
      %v1090 = vsub.f32 %v1062, %v1010
      %v1091 = vsub.f32 %v1064, %v1011
      %v1092 = vsub.f32 %v1066, %v1012
      %v1093 = vsub.f32 %v1068, %v1013
      %v1094 = vsub.f32 %v1070, %v1014
      %v1095 = vsub.f32 %v1072, %v1015
      %v1096 = vsub.f32 %v1074, %v1016
      %v1097 = vsub.f32 %v1076, %v1017
      %v1098 = vsub.f32 %v1078, %v1018
      %v1099 = vsub.f32 %v1080, %v1019
      %v1100 = vsub.f32 %v1082, %v1020
      %v1101 = vsub.f32 %v1084, %v1021
      %v1102 = vsub.f32 %v1086, %v1022
      %v1103 = vmul.f32 %v1087, -1.0
      %v1104 = vmul.f32 %v1088, -1.0
      %v1105 = vmul.f32 %v1089, -1.0
      %v1106 = vmul.f32 %v1090, -1.0
      %v1107 = vmul.f32 %v1091, -1.0
      %v1108 = vmul.f32 %v1092, -1.0
      %v1109 = vmul.f32 %v1093, -1.0
      %v1110 = vmul.f32 %v1094, -1.0
      %v1111 = vmul.f32 %v1095, -1.0
      %v1112 = vmul.f32 %v1096, -1.0
      %v1113 = vmul.f32 %v1097, -1.0
      %v1114 = vmul.f32 %v1098, -1.0
      %v1115 = vmul.f32 %v1099, -1.0
      %v1116 = vmul.f32 %v1100, -1.0
      %v1117 = vmul.f32 %v1101, -1.0
      %v1118 = vmul.f32 %v1102, -1.0
      %v1119 = vlaneseq
      %v1120 = vshrl.u32 %v1119, 7
      %v1121 = vadd.s32 %v1120, 8
      %v1122 = vadd.s32 %v1120, 16
      %v1123 = vadd.s32 %v1120, 24
      %v1124 = vadd.s32 %v1120, 32
      %v1125 = vadd.s32 %v1120, 40
      %v1126 = vadd.s32 %v1120, 48
      %v1127 = vadd.s32 %v1120, 56
      %v1128 = vadd.s32 %v1120, 64
      %v1129 = vadd.s32 %v1120, 72
      %v1130 = vadd.s32 %v1120, 80
      %v1131 = vadd.s32 %v1120, 88
      %v1132 = vadd.s32 %v1120, 96
      %v1133 = vadd.s32 %v1120, 104
      %v1134 = vadd.s32 %v1120, 112
      %v1135 = vadd.s32 %v1120, 120
      %v1136 = vstv %s385
      %v1137 = vadd.s32 %v1136, %v1120
      %v1138 = vadd.s32 %v1136, %v1121
      %v1139 = vadd.s32 %v1136, %v1122
      %v1140 = vadd.s32 %v1136, %v1123
      %v1141 = vadd.s32 %v1136, %v1124
      %v1142 = vadd.s32 %v1136, %v1125
      %v1143 = vadd.s32 %v1136, %v1126
      %v1144 = vadd.s32 %v1136, %v1127
      %v1145 = vadd.s32 %v1136, %v1128
      %v1146 = vadd.s32 %v1136, %v1129
      %v1147 = vadd.s32 %v1136, %v1130
      %v1148 = vadd.s32 %v1136, %v1131
      %v1149 = vadd.s32 %v1136, %v1132
      %v1150 = vadd.s32 %v1136, %v1133
      %v1151 = vadd.s32 %v1136, %v1134
      %v1152 = vadd.s32 %v1136, %v1135
      %vm1153 = vcmp.lt.s32.totalorder %v1137, 8
      %vm1154 = vcmp.lt.s32.totalorder %v1138, 8
      %vm1155 = vcmp.lt.s32.totalorder %v1139, 8
      %vm1156 = vcmp.lt.s32.totalorder %v1140, 8
      %vm1157 = vcmp.lt.s32.totalorder %v1141, 8
      %vm1158 = vcmp.lt.s32.totalorder %v1142, 8
      %vm1159 = vcmp.lt.s32.totalorder %v1143, 8
      %vm1160 = vcmp.lt.s32.totalorder %v1144, 8
      %vm1161 = vcmp.lt.s32.totalorder %v1145, 8
      %vm1162 = vcmp.lt.s32.totalorder %v1146, 8
      %vm1163 = vcmp.lt.s32.totalorder %v1147, 8
      %vm1164 = vcmp.lt.s32.totalorder %v1148, 8
      %vm1165 = vcmp.lt.s32.totalorder %v1149, 8
      %vm1166 = vcmp.lt.s32.totalorder %v1150, 8
      %vm1167 = vcmp.lt.s32.totalorder %v1151, 8
      %vm1168 = vcmp.lt.s32.totalorder %v1152, 8
      %v1169 = vsel %vm1153, %v1103, 0.0
      %v1170 = vsel %vm1154, %v1104, 0.0
      %v1171 = vsel %vm1155, %v1105, 0.0
      %v1172 = vsel %vm1156, %v1106, 0.0
      %v1173 = vsel %vm1157, %v1107, 0.0
      %v1174 = vsel %vm1158, %v1108, 0.0
      %v1175 = vsel %vm1159, %v1109, 0.0
      %v1176 = vsel %vm1160, %v1110, 0.0
      %v1177 = vsel %vm1161, %v1111, 0.0
      %v1178 = vsel %vm1162, %v1112, 0.0
      %v1179 = vsel %vm1163, %v1113, 0.0
      %v1180 = vsel %vm1164, %v1114, 0.0
      %v1181 = vsel %vm1165, %v1115, 0.0
      %v1182 = vsel %vm1166, %v1116, 0.0
      %v1183 = vsel %vm1167, %v1117, 0.0
      %v1184 = vsel %vm1168, %v1118, 0.0
      %vm1185 = vcmask 7168
      %v1186 = vsel %vm1185, %v1169, 0.0
      %v1187 = vsel %vm1185, %v1170, 0.0
      %v1188 = vadd.f32 %v1186, %v1187
      %v1189 = vsel %vm1185, %v1171, 0.0
      %v1190 = vadd.f32 %v1188, %v1189
      %v1191 = vsel %vm1185, %v1172, 0.0
      %v1192 = vadd.f32 %v1190, %v1191
      %v1193 = vsel %vm1185, %v1173, 0.0
      %v1194 = vadd.f32 %v1192, %v1193
      %v1195 = vsel %vm1185, %v1174, 0.0
      %v1196 = vadd.f32 %v1194, %v1195
      %v1197 = vsel %vm1185, %v1175, 0.0
      %v1198 = vadd.f32 %v1196, %v1197
      %v1199 = vsel %vm1185, %v1176, 0.0
      %v1200 = vadd.f32 %v1198, %v1199
      %v1201 = vsel %vm1185, %v1177, 0.0
      %v1202 = vadd.f32 %v1200, %v1201
      %v1203 = vsel %vm1185, %v1178, 0.0
      %v1204 = vadd.f32 %v1202, %v1203
      %v1205 = vsel %vm1185, %v1179, 0.0
      %v1206 = vadd.f32 %v1204, %v1205
      %v1207 = vsel %vm1185, %v1180, 0.0
      %v1208 = vadd.f32 %v1206, %v1207
      %v1209 = vsel %vm1185, %v1181, 0.0
      %v1210 = vadd.f32 %v1208, %v1209
      %v1211 = vsel %vm1185, %v1182, 0.0
      %v1212 = vadd.f32 %v1210, %v1211
      %v1213 = vsel %vm1185, %v1183, 0.0
      %v1214 = vadd.f32 %v1212, %v1213
      %v1215 = vsel %vm1185, %v1184, 0.0
      %v1216 = vadd.f32 %v1214, %v1215
      %1217 = vadd.xlane.f32.xlu0 %v1216
      %v1218 = vpop.xlane.xlu0 %1217
      %v1219 = vrot.slane %v1218, 4
      %v1220 = vadd.f32 %v1218, %v1219
      %v1221 = vrot.slane %v1220, 2
      %v1222 = vadd.f32 %v1220, %v1221
      %v1223 = vrot.slane %v1222, 1
      %v1224 = vadd.f32 %v1222, %v1223
      %s1225 = vtos %v1224
      %v1226 = vlaneseq
      %v1227 = vand.u32 %v1226, 127
      %vm1228 = vcmp.eq.s32.totalorder %v1120, 0
      %vm1229 = vcmp.eq.s32.totalorder %v1227, 0
      %vm1230 = vmand %vm1228, %vm1229
      %v1231 = vstv %s1225
      %v1232 = vsel %vm1230, %v1231, 0.0
      %1233 = vst [vmem:[#allocation4] sm:$0xff] %v1232
    $region37: #{tpu_custom_call.1} parent=1 // pred_fallthru
      _
    // Predicated region
    $region38: #{tpu_custom_call.1} parent=1 // pred_check
      _
    $region39: #{tpu_custom_call.1} parent=1 // pred_check_branch
      %1235 = sbr.rel (0) target = $region41
    $region40: #{tpu_custom_call.1} parent=1 // pred_region
      %s1237 = ssub.s32 128, 128
      %1238 = vsyncadd [#allocation5], %s1237
      %s1240 = sshll.u32 [#allocation4], 4
      %s1241 = int_to_ptr.vmem [resolvable:$true] %s1240
      %1243 = dma.vmem_to_hbm [thread:$0]  %s1241, 128, %s5, [#allocation5]
    $region41: #{tpu_custom_call.1} parent=1 // pred_fallthru
      _
    // Predicated region
    $region42: #{tpu_custom_call.1} parent=1 // pred_check
      _
    $region43: #{tpu_custom_call.1} parent=1 // pred_check_branch
      %1245 = sbr.rel (0) target = $region45
    $region44: #{tpu_custom_call.1} parent=1 // pred_region
      %1246 = dma.done [#allocation5], 128
    $region45: #{tpu_custom_call.1} parent=1 // pred_fallthru
      _
    %1247 = vsyncpa [#allocation5], 1

</llo_original>
